<compile_context>
chip_gen: v7x
topology: tpu7x:2x2x1
jax: 0.10.0
libtpu: 0.0.40
codegen_flags: <defaults>
</compile_context>

<pallas_src>
import math

import jax
import jax.numpy as jnp
from jax.experimental import pallas as pl
from jax.experimental.pallas import tpu as pltpu

LANE = 128            # last dim of the 2D slab -> vreg lanes (unmasked full vst)
ROW_ALIGN = 32        # block row multiple; 32 satisfies f32/bf16/uint8 sublane tiling
SMALL_N = 1 << 20     # below ~1M elements a fused XLA op beats kernel launch overhead

_VMEM_BUDGET_CACHE = None


def _vmem_budget():
    """(buffer_budget_bytes, vmem_limit_bytes), safe on v5e/v6e/v7x."""
    global _VMEM_BUDGET_CACHE
    if _VMEM_BUDGET_CACHE is None:
        try:
            cap = int(pltpu.get_tpu_info().vmem_capacity_bytes)
        except Exception:
            cap = 64 * 1024 * 1024  # conservative fallback: v7x per-TC VMEM
        buf = min(cap // 2, 32 * 1024 * 1024)            # double-buffered in+out blocks
        limit = min(cap - 8 * 1024 * 1024, buf + 16 * 1024 * 1024)
        _VMEM_BUDGET_CACHE = (buf, limit)
    return _VMEM_BUDGET_CACHE


def _round_up(v, m):
    return ((v + m - 1) // m) * m


def _pick_tile_rows(rows, in_bytes, out_bytes, buf_budget):
    """Pick block rows: even #blocks >= 2 (v7x megacore), capped by VMEM budget."""
    # VMEM bytes per block-row: input block + output block, double-buffered.
    per_row = 2 * LANE * (in_bytes + out_bytes)
    max_rows = max(ROW_ALIGN, (buf_budget // per_row) // ROW_ALIGN * ROW_ALIGN)
    if rows <= 2 * ROW_ALIGN:
        return rows  # tiny slab: single full-extent block
    n_blocks = max(2, 2 * pl.cdiv(rows, 2 * max_rows))   # even block count
    return min(max_rows, _round_up(pl.cdiv(rows, n_blocks), ROW_ALIGN))


def _scale_kernel(x_ref, o_ref):
    # elementwise: out = x / 255 (computed in f32, cast to the output dtype)
    x = x_ref[...].astype(jnp.float32)
    o_ref[...] = (x * jnp.float32(1.0 / 255.0)).astype(o_ref.dtype)


def _scale_2d(x2d, out_dtype):
    """Run the streaming kernel over a (rows, LANE) slab."""
    rows = x2d.shape[0]
    in_bytes = jnp.dtype(x2d.dtype).itemsize
    out_bytes = jnp.dtype(out_dtype).itemsize
    buf_budget, vmem_limit = _vmem_budget()
    tile_rows = _pick_tile_rows(rows, in_bytes, out_bytes, buf_budget)
    grid = (pl.cdiv(rows, tile_rows),)
    return pl.pallas_call(
        _scale_kernel,
        out_shape=jax.ShapeDtypeStruct((rows, LANE), out_dtype),
        grid=grid,
        in_specs=[pl.BlockSpec((tile_rows, LANE), lambda i: (i, 0))],
        out_specs=pl.BlockSpec((tile_rows, LANE), lambda i: (i, 0)),
        compiler_params=pltpu.CompilerParams(
            dimension_semantics=("parallel",),
            vmem_limit_bytes=vmem_limit,
        ),
    )(x2d)


def scale_from_0_255_to_0_1(x):
    """Pallas equivalent of ScaleFrom_0_255_To_0_1.forward: input.div(255).

    Floating inputs keep their dtype; integer/bool inputs promote to float32
    (torch default float dtype). Large, 128-aligned inputs stream through the
    Pallas kernel; small or ragged inputs use a fused XLA convert+mul.
    """
    x = jnp.asarray(x)
    out_dtype = x.dtype if jnp.issubdtype(x.dtype, jnp.floating) else jnp.float32
    orig_shape = x.shape
    n = math.prod(orig_shape) if orig_shape else 1

    # Small or ragged (n % 128 != 0) inputs: plain XLA is already HBM-bound and
    # avoids kernel launch overhead / extra output passes.
    if n < SMALL_N or n % LANE != 0:
        return (x.astype(jnp.float32) * jnp.float32(1.0 / 255.0)).astype(out_dtype)

    x2d = jnp.ravel(x).reshape(n // LANE, LANE)          # metadata-only reshapes
    return _scale_2d(x2d, out_dtype).reshape(orig_shape)


if __name__ == "__main__":
    key = jax.random.PRNGKey(0)
    k1, k2 = jax.random.split(key)

    # 1) Small module-sized input (2,4,16,16): exercises the XLA bypass path.
    x_small = jax.random.uniform(k1, (2, 4, 16, 16), dtype=jnp.float32) * 255.0
    y_small = jax.block_until_ready(scale_from_0_255_to_0_1(x_small))
    assert y_small.shape == x_small.shape and y_small.dtype == jnp.float32
    assert jnp.max(jnp.abs(y_small - x_small / 255.0)) < 1e-6

    # 2) Larger f32 input (2,4,256,512) = 1,048,576 elems: exercises the Pallas
    #    kernel path with an even 2-step grid.
    x_big = jax.random.uniform(k2, (2, 4, 256, 512), dtype=jnp.float32) * 255.0
    y_big = jax.block_until_ready(scale_from_0_255_to_0_1(x_big))
    assert y_big.shape == x_big.shape and y_big.dtype == jnp.float32
    assert jnp.max(jnp.abs(y_big - x_big / 255.0)) < 1e-6

    # 3) uint8 image data through the kernel path: cast happens on-chip,
    #    output promotes to float32.
    xu8 = x_big.astype(jnp.uint8)
    yu8 = jax.block_until_ready(scale_from_0_255_to_0_1(xu8))
    assert yu8.dtype == jnp.float32
    assert jnp.max(jnp.abs(yu8 - xu8.astype(jnp.float32) / 255.0)) < 1e-6

    # 4) Ragged total element count (not a multiple of 128): handled by the
    #    fused XLA path (no concatenate, no extra HBM pass).
    xr = jax.random.uniform(jax.random.PRNGKey(1), (3, 5, 7), dtype=jnp.float32) * 255.0
    yr = jax.block_until_ready(scale_from_0_255_to_0_1(xr))
    assert jnp.max(jnp.abs(yr - xr / 255.0)) < 1e-6

    # 5) Floating dtype is preserved (torch .div does not promote floats).
    xbf = (x_small).astype(jnp.bfloat16)
    ybf = jax.block_until_ready(scale_from_0_255_to_0_1(xbf))
    assert ybf.dtype == jnp.bfloat16
    ref_bf = (xbf.astype(jnp.float32) / 255.0).astype(jnp.bfloat16)
    assert jnp.max(jnp.abs(ybf.astype(jnp.float32) - ref_bf.astype(jnp.float32))) < 1e-2

    print("KERNEL_OK")
</pallas_src>

<mosaic_0001>
module attributes {stable_mosaic.version = 11 : i64} {
  func.func @_scale_kernel(%arg0: i32, %arg1: memref<4096x128xf32, #tpu.memory_space<vmem>>, %arg2: memref<4096x128xf32, #tpu.memory_space<vmem>>) attributes {dimension_semantics = [#tpu.dimension_semantics<parallel>], iteration_bounds = array<i64: 2>, scalar_prefetch = 0 : i64, scratch_operands = 0 : i64, tpu.core_type = #tpu.core_type<tc>, window_params = [{transform_indices = @transform_0, window_bounds = array<i64: 4096, 128>}, {transform_indices = @transform_1, window_bounds = array<i64: 4096, 128>}]} {
    %c0 = arith.constant 0 : index
    %c0_0 = arith.constant 0 : index
    %0 = vector.load %arg1[%c0, %c0_0] : memref<4096x128xf32, #tpu.memory_space<vmem>>, vector<4096x128xf32>
    %cst = arith.constant 0.00392156886 : f32
    %1 = vector.broadcast %cst : f32 to vector<4096x128xf32>
    %2 = arith.mulf %0, %1 : vector<4096x128xf32>
    %c0_1 = arith.constant 0 : index
    %c0_2 = arith.constant 0 : index
    %3 = vector.load %arg2[%c0_1, %c0_2] : memref<4096x128xf32, #tpu.memory_space<vmem>>, vector<4096x128xf32>
    tpu.vector_store %arg2[%c0_1, %c0_2], %2 {strides = array<i32>} : memref<4096x128xf32, #tpu.memory_space<vmem>>, vector<4096x128xf32>,
    return
  }
  func.func @transform_0(%arg0: i32) -> (i32, i32) {
    %c0_i32 = arith.constant 0 : i32
    %c0_i32_0 = arith.constant 0 : i32
    return %arg0, %c0_i32 : i32, i32
  }
  func.func @transform_1(%arg0: i32) -> (i32, i32) {
    %c0_i32 = arith.constant 0 : i32
    %c0_i32_0 = arith.constant 0 : i32
    return %arg0, %c0_i32 : i32, i32
  }
}

</mosaic_0001>

<llo_original>
// kernel: tpu_custom_call.1
$region0: #{tpu_custom_call.1}
  #allocation0 [shape = 'u32[]', space=smem, size = 0x4, offset = 0x4, fixed_abs, tag = 'smem constant byte address 0x4 - core index']
  #allocation1 [shape = 'u32[144,128]{1,0:T(1,128)}', space=vmem, size = 0x12000, scoped, tag = 'internal scratch']
  %s0 = inlined_call_operand.hbm [shape: f32[8192,128], index: 0, kind: input, shape index: {}]
  %s1 = inlined_call_operand.hbm [shape: f32[8192,128], index: 1, kind: output, shape index: {}]
  %s2 = sld [smem:[#allocation0]]
  $region41: #{tpu_custom_call.1} parent=0
    _
  %s4 = ssub.s32 1, %s2
  %s5 = scalar_select 0, %s4, %s2
  $region1: #{tpu_custom_call.1} parent=0
    #allocation2 [shape = 'u8[4194304]{0}', space=vmem, size = 0x400000, scoped, tag = 'input window, operand 0']
    #allocation3 [shape = 's32[2]{0}', space=sflag, size = 0x8, scoped, tag = 'scoped memory for tpu_custom_call.1']
    #allocation4 [shape = 's32[2]{0}', space=sflag, size = 0x8, scoped, tag = 'scoped memory for tpu_custom_call.1']
    #allocation5 [shape = 'u8[4194304]{0}', space=vmem, size = 0x400000, scoped, tag = 'output window, operand 0']
    %6 = vsyncpa [#allocation3], 0
    %s7 = scalar_lea.sflag [#allocation3], 1
    %8 = vsyncpa %s7, 0
    %9 = vsyncpa [#allocation4], 0
    %s10 = scalar_lea.sflag [#allocation4], 1
    %11 = vsyncpa %s10, 0
    loop: start=0, step=1, limit=4
    $region2: #{tpu_custom_call.1} parent=1 // loop_pre_header
      _
    $region3: #{tpu_custom_call.1} parent=1 // loop_header
      %s13 = sphi 0, %s17
      %p14 = scmp.ge.s32.totalorder %s13, 4
      %s23 = sphi 0, %s25
      %s26 = sphi 0, %s23
      %s27 = sphi 0, %s26
      %s43 = sphi 0, %s27
      %s49 = sphi 0, %s51
      %s52 = sphi 0, %s49
      %s53 = sphi 0, %s52
      %s69 = sphi 0, %s53
    $region4: #{tpu_custom_call.1} parent=1 // loop_header_branch
      %16 = sbr.rel (%p14) target = $region8
    $region5: #{tpu_custom_call.1} parent=1 // loop_body
      %s18 = ssub.s32 %s13, 1
      %s19 = ssub.s32 %s13, 2
      %s20 = sadd.s32 %s13, 1
      %s21 = ssub.s32 %s13, %s20
      %p22 = scmp.eq.s32.totalorder %s21, 0
      %s24 = sadd.s32 %s23, 1
      %s25 = scalar_select %p22, %s23, %s24
      %p28 = pneg %p22
      %p29 = scmp.eq.s32.totalorder %s13, 1
      %p30 = por %p28, %p29
      %p31 = scmp.ne.s32.totalorder %s23, %s26
      %p32 = scmp.eq.s32.totalorder %s13, 0
      %p33 = por %p31, %p32
      %p34 = scmp.ne.s32.totalorder %s23, %s26
      %p35 = scmp.eq.s32.totalorder %s18, 1
      %p36 = por %p34, %p35
      %p37 = scmp.ne.s32.totalorder %s26, %s27
      %p38 = scmp.eq.s32.totalorder %s18, 0
      %p39 = por %p37, %p38
      %p40 = scmp.ne.s32.totalorder %s26, %s27
      %p41 = scmp.eq.s32.totalorder %s19, 1
      %p42 = por %p40, %p41
      %p44 = scmp.ne.s32.totalorder %s27, %s43
      %p45 = scmp.eq.s32.totalorder %s19, 0
      %p46 = por %p44, %p45
      %s47 = ssub.s32 %s13, %s20
      %p48 = scmp.eq.s32.totalorder %s47, 0
      %s50 = sadd.s32 %s49, 1
      %s51 = scalar_select %p48, %s49, %s50
      %p54 = pneg %p48
      %p55 = scmp.eq.s32.totalorder %s13, 1
      %p56 = por %p54, %p55
      %p57 = scmp.ne.s32.totalorder %s49, %s52
      %p58 = scmp.eq.s32.totalorder %s13, 0
      %p59 = por %p57, %p58
      %p60 = scmp.ne.s32.totalorder %s49, %s52
      %p61 = scmp.eq.s32.totalorder %s18, 1
      %p62 = por %p60, %p61
      %p63 = scmp.ne.s32.totalorder %s52, %s53
      %p64 = scmp.eq.s32.totalorder %s18, 0
      %p65 = por %p63, %p64
      %p66 = scmp.ne.s32.totalorder %s52, %s53
      %p67 = scmp.eq.s32.totalorder %s19, 1
      %p68 = por %p66, %p67
      %p70 = scmp.ne.s32.totalorder %s53, %s69
      %p71 = scmp.eq.s32.totalorder %s19, 0
      %p72 = por %p70, %p71
      %p73 = scmp.le.s32.totalorder 1, %s13
      %p74 = scmp.lt.s32.totalorder %s13, 3
      %p75 = pnand %p73, %p74
      %p76 = pneg %p75
      // Predicated region
      $region9: #{tpu_custom_call.1} parent=5 // pred_check
        _
      $region10: #{tpu_custom_call.1} parent=5 // pred_check_branch
        %78 = sbr.rel (%p75) target = $region12
      $region11: #{tpu_custom_call.1} parent=5 // pred_region
        %s79 = ssub.s32 %s13, 1
      $region12: #{tpu_custom_call.1} parent=5 // pred_fallthru
        _
      %p80 = scmp.lt.s32.totalorder %s13, 2
      // Predicated region
      $region13: #{tpu_custom_call.1} parent=5 // pred_check
        %p81 = pneg %p80
      $region14: #{tpu_custom_call.1} parent=5 // pred_check_branch
        %83 = sbr.rel (%p81) target = $region16
      $region15: #{tpu_custom_call.1} parent=5 // pred_region
        // Predicated region
        $region17: #{tpu_custom_call.1} parent=15 // pred_check
          %p84 = pneg %p33
        $region18: #{tpu_custom_call.1} parent=15 // pred_check_branch
          %86 = sbr.rel (%p84) target = $region20
        $region19: #{tpu_custom_call.1} parent=15 // pred_region
          %s87 = sand.u32 %s23, 1
          %s88 = scalar_lea.sflag [#allocation3], %s87
          %s89 = sand.u32 %s23, 1
          %s90 = smul.addr %s89, 4096
          %s91 = scalar_lea.vmem [#allocation2], %s90
          %s92 = smul.u32 512, %s13
          %s94 = ssub.s32 65536, 65536
          %95 = vsyncadd %s88, %s94
          %s96 = smul.addr %s92, 128
          %s97 = scalar_lea.hbm %s0, %s96
          %s98 = sshll.u32 %s91, 4
          %s99 = int_to_ptr.vmem [resolvable:$true] %s98
          %104 = dma.hbm_to_vmem [thread:$0]  %s97, 65536, %s99, %s88, 128, 128, 8
        $region20: #{tpu_custom_call.1} parent=15 // pred_fallthru
          _
      $region16: #{tpu_custom_call.1} parent=5 // pred_fallthru
        _
      %p105 = scmp.le.s32.totalorder 1, %s13
      %p106 = scmp.lt.s32.totalorder %s13, 3
      %p107 = pnand %p105, %p106
      %p108 = pneg %p107
      // Predicated region
      $region21: #{tpu_custom_call.1} parent=5 // pred_check
        _
      $region22: #{tpu_custom_call.1} parent=5 // pred_check_branch
        %110 = sbr.rel (%p107) target = $region24
      $region23: #{tpu_custom_call.1} parent=5 // pred_region
        %s111 = ssub.s32 %s13, 1
        %s112 = sand.u32 %s26, 1
        %s113 = scalar_lea.sflag [#allocation3], %s112
        %s114 = sand.u32 %s26, 1
        %s115 = smul.addr %s114, 4096
        %s116 = scalar_lea.vmem [#allocation2], %s115
        // Predicated region
        $region25: #{tpu_custom_call.1} parent=23 // pred_check
          %p117 = pneg %p39
        $region26: #{tpu_custom_call.1} parent=23 // pred_check_branch
          %119 = sbr.rel (%p117) target = $region28
        $region27: #{tpu_custom_call.1} parent=23 // pred_region
          %120 = dma.done %s113, 65536
        $region28: #{tpu_custom_call.1} parent=23 // pred_fallthru
          _
        %s121 = sand.u32 %s26, 1
        %s122 = scalar_lea.sflag [#allocation3], %s121
        %s123 = sand.u32 %s26, 1
        %s124 = smul.addr %s123, 4096
        %s125 = scalar_lea.vmem [#allocation2], %s124
        %p126 = pneg %p39
        %p127 = pneg %p36
        %p128 = pneg %p65
        %p129 = pneg %p62
        %s130 = sand.u32 %s52, 1
        %s131 = scalar_lea.sflag [#allocation4], %s130
        %s132 = sand.u32 %s52, 1
        %s133 = smul.addr %s132, 4096
        %s134 = scalar_lea.vmem [#allocation5], %s133
        %s135 = smul.u32 512, %s18
        %s136 = smul.u32 512, %s18
        %v137 = vld [vmem:[%s116] sm:$0xff]
        %v138 = vld [vmem:[%s116 + $0x8] sm:$0xff]
        %v139 = vld [vmem:[%s116 + $0x10] sm:$0xff]
        %v140 = vld [vmem:[%s116 + $0x18] sm:$0xff]
        %v141 = vld [vmem:[%s116 + $0x20] sm:$0xff]
        %v142 = vld [vmem:[%s116 + $0x28] sm:$0xff]
        %v143 = vld [vmem:[%s116 + $0x30] sm:$0xff]
        %v144 = vld [vmem:[%s116 + $0x38] sm:$0xff]
        %v145 = vld [vmem:[%s116 + $0x40] sm:$0xff]
        %v146 = vld [vmem:[%s116 + $0x48] sm:$0xff]
        %v147 = vld [vmem:[%s116 + $0x50] sm:$0xff]
        %v148 = vld [vmem:[%s116 + $0x58] sm:$0xff]
        %v149 = vld [vmem:[%s116 + $0x60] sm:$0xff]
        %v150 = vld [vmem:[%s116 + $0x68] sm:$0xff]
        %v151 = vld [vmem:[%s116 + $0x70] sm:$0xff]
        %v152 = vld [vmem:[%s116 + $0x78] sm:$0xff]
        %v153 = vld [vmem:[%s116 + $0x80] sm:$0xff]
        %v154 = vld [vmem:[%s116 + $0x88] sm:$0xff]
        %v155 = vld [vmem:[%s116 + $0x90] sm:$0xff]
        %v156 = vld [vmem:[%s116 + $0x98] sm:$0xff]
        %v157 = vld [vmem:[%s116 + $0xa0] sm:$0xff]
        %v158 = vld [vmem:[%s116 + $0xa8] sm:$0xff]
        %v159 = vld [vmem:[%s116 + $0xb0] sm:$0xff]
        %v160 = vld [vmem:[%s116 + $0xb8] sm:$0xff]
        %v161 = vld [vmem:[%s116 + $0xc0] sm:$0xff]
        %v162 = vld [vmem:[%s116 + $0xc8] sm:$0xff]
        %v163 = vld [vmem:[%s116 + $0xd0] sm:$0xff]
        %v164 = vld [vmem:[%s116 + $0xd8] sm:$0xff]
        %v165 = vld [vmem:[%s116 + $0xe0] sm:$0xff]
        %v166 = vld [vmem:[%s116 + $0xe8] sm:$0xff]
        %v167 = vld [vmem:[%s116 + $0xf0] sm:$0xff]
        %v168 = vld [vmem:[%s116 + $0xf8] sm:$0xff]
        %v169 = vld [vmem:[%s116 + $0x100] sm:$0xff]
        %v170 = vld [vmem:[%s116 + $0x108] sm:$0xff]
        %v171 = vld [vmem:[%s116 + $0x110] sm:$0xff]
        %v172 = vld [vmem:[%s116 + $0x118] sm:$0xff]
        %v173 = vld [vmem:[%s116 + $0x120] sm:$0xff]
        %v174 = vld [vmem:[%s116 + $0x128] sm:$0xff]
        %v175 = vld [vmem:[%s116 + $0x130] sm:$0xff]
        %v176 = vld [vmem:[%s116 + $0x138] sm:$0xff]
        %v177 = vld [vmem:[%s116 + $0x140] sm:$0xff]
        %v178 = vld [vmem:[%s116 + $0x148] sm:$0xff]
        %v179 = vld [vmem:[%s116 + $0x150] sm:$0xff]
        %v180 = vld [vmem:[%s116 + $0x158] sm:$0xff]
        %v181 = vld [vmem:[%s116 + $0x160] sm:$0xff]
        %v182 = vld [vmem:[%s116 + $0x168] sm:$0xff]
        %v183 = vld [vmem:[%s116 + $0x170] sm:$0xff]
        %v184 = vld [vmem:[%s116 + $0x178] sm:$0xff]
        %v185 = vld [vmem:[%s116 + $0x180] sm:$0xff]
        %v186 = vld [vmem:[%s116 + $0x188] sm:$0xff]
        %v187 = vld [vmem:[%s116 + $0x190] sm:$0xff]
        %v188 = vld [vmem:[%s116 + $0x198] sm:$0xff]
        %v189 = vld [vmem:[%s116 + $0x1a0] sm:$0xff]
        %v190 = vld [vmem:[%s116 + $0x1a8] sm:$0xff]
        %v191 = vld [vmem:[%s116 + $0x1b0] sm:$0xff]
        %v192 = vld [vmem:[%s116 + $0x1b8] sm:$0xff]
        %v193 = vld [vmem:[%s116 + $0x1c0] sm:$0xff]
        %v194 = vld [vmem:[%s116 + $0x1c8] sm:$0xff]
        %v195 = vld [vmem:[%s116 + $0x1d0] sm:$0xff]
        %v196 = vld [vmem:[%s116 + $0x1d8] sm:$0xff]
        %v197 = vld [vmem:[%s116 + $0x1e0] sm:$0xff]
        %v198 = vld [vmem:[%s116 + $0x1e8] sm:$0xff]
        %v199 = vld [vmem:[%s116 + $0x1f0] sm:$0xff]
        %v200 = vld [vmem:[%s116 + $0x1f8] sm:$0xff]
        %v201 = vld [vmem:[%s116 + $0x200] sm:$0xff]
        %v202 = vld [vmem:[%s116 + $0x208] sm:$0xff]
        %v203 = vld [vmem:[%s116 + $0x210] sm:$0xff]
        %v204 = vld [vmem:[%s116 + $0x218] sm:$0xff]
        %v205 = vld [vmem:[%s116 + $0x220] sm:$0xff]
        %v206 = vld [vmem:[%s116 + $0x228] sm:$0xff]
        %v207 = vld [vmem:[%s116 + $0x230] sm:$0xff]
        %v208 = vld [vmem:[%s116 + $0x238] sm:$0xff]
        %v209 = vld [vmem:[%s116 + $0x240] sm:$0xff]
        %v210 = vld [vmem:[%s116 + $0x248] sm:$0xff]
        %v211 = vld [vmem:[%s116 + $0x250] sm:$0xff]
        %v212 = vld [vmem:[%s116 + $0x258] sm:$0xff]
        %v213 = vld [vmem:[%s116 + $0x260] sm:$0xff]
        %v214 = vld [vmem:[%s116 + $0x268] sm:$0xff]
        %v215 = vld [vmem:[%s116 + $0x270] sm:$0xff]
        %v216 = vld [vmem:[%s116 + $0x278] sm:$0xff]
        %v217 = vld [vmem:[%s116 + $0x280] sm:$0xff]
        %v218 = vld [vmem:[%s116 + $0x288] sm:$0xff]
        %v219 = vld [vmem:[%s116 + $0x290] sm:$0xff]
        %v220 = vld [vmem:[%s116 + $0x298] sm:$0xff]
        %v221 = vld [vmem:[%s116 + $0x2a0] sm:$0xff]
        %v222 = vld [vmem:[%s116 + $0x2a8] sm:$0xff]
        %v223 = vld [vmem:[%s116 + $0x2b0] sm:$0xff]
        %v224 = vld [vmem:[%s116 + $0x2b8] sm:$0xff]
        %v225 = vld [vmem:[%s116 + $0x2c0] sm:$0xff]
        %v226 = vld [vmem:[%s116 + $0x2c8] sm:$0xff]
        %v227 = vld [vmem:[%s116 + $0x2d0] sm:$0xff]
        %v228 = vld [vmem:[%s116 + $0x2d8] sm:$0xff]
        %v229 = vld [vmem:[%s116 + $0x2e0] sm:$0xff]
        %v230 = vld [vmem:[%s116 + $0x2e8] sm:$0xff]
        %v231 = vld [vmem:[%s116 + $0x2f0] sm:$0xff]
        %v232 = vld [vmem:[%s116 + $0x2f8] sm:$0xff]
        %v233 = vld [vmem:[%s116 + $0x300] sm:$0xff]
        %v234 = vld [vmem:[%s116 + $0x308] sm:$0xff]
        %v235 = vld [vmem:[%s116 + $0x310] sm:$0xff]
        %v236 = vld [vmem:[%s116 + $0x318] sm:$0xff]
        %v237 = vld [vmem:[%s116 + $0x320] sm:$0xff]
        %v238 = vld [vmem:[%s116 + $0x328] sm:$0xff]
        %v239 = vld [vmem:[%s116 + $0x330] sm:$0xff]
        %v240 = vld [vmem:[%s116 + $0x338] sm:$0xff]
        %v241 = vld [vmem:[%s116 + $0x340] sm:$0xff]
        %v242 = vld [vmem:[%s116 + $0x348] sm:$0xff]
        %v243 = vld [vmem:[%s116 + $0x350] sm:$0xff]
        %v244 = vld [vmem:[%s116 + $0x358] sm:$0xff]
        %v245 = vld [vmem:[%s116 + $0x360] sm:$0xff]
        %v246 = vld [vmem:[%s116 + $0x368] sm:$0xff]
        %v247 = vld [vmem:[%s116 + $0x370] sm:$0xff]
        %v248 = vld [vmem:[%s116 + $0x378] sm:$0xff]
        %v249 = vld [vmem:[%s116 + $0x380] sm:$0xff]
        %v250 = vld [vmem:[%s116 + $0x388] sm:$0xff]
        %v251 = vld [vmem:[%s116 + $0x390] sm:$0xff]
        %v252 = vld [vmem:[%s116 + $0x398] sm:$0xff]
        %v253 = vld [vmem:[%s116 + $0x3a0] sm:$0xff]
        %v254 = vld [vmem:[%s116 + $0x3a8] sm:$0xff]
        %v255 = vld [vmem:[%s116 + $0x3b0] sm:$0xff]
        %v256 = vld [vmem:[%s116 + $0x3b8] sm:$0xff]
        %v257 = vld [vmem:[%s116 + $0x3c0] sm:$0xff]
        %v258 = vld [vmem:[%s116 + $0x3c8] sm:$0xff]
        %v259 = vld [vmem:[%s116 + $0x3d0] sm:$0xff]
        %v260 = vld [vmem:[%s116 + $0x3d8] sm:$0xff]
        %v261 = vld [vmem:[%s116 + $0x3e0] sm:$0xff]
        %v262 = vld [vmem:[%s116 + $0x3e8] sm:$0xff]
        %v263 = vld [vmem:[%s116 + $0x3f0] sm:$0xff]
        %v264 = vld [vmem:[%s116 + $0x3f8] sm:$0xff]
        %v265 = vld [vmem:[%s116 + $0x400] sm:$0xff]
        %v266 = vld [vmem:[%s116 + $0x408] sm:$0xff]
        %v267 = vld [vmem:[%s116 + $0x410] sm:$0xff]
        %v268 = vld [vmem:[%s116 + $0x418] sm:$0xff]
        %v269 = vld [vmem:[%s116 + $0x420] sm:$0xff]
        %v270 = vld [vmem:[%s116 + $0x428] sm:$0xff]
        %v271 = vld [vmem:[%s116 + $0x430] sm:$0xff]
        %v272 = vld [vmem:[%s116 + $0x438] sm:$0xff]
        %v273 = vld [vmem:[%s116 + $0x440] sm:$0xff]
        %v274 = vld [vmem:[%s116 + $0x448] sm:$0xff]
        %v275 = vld [vmem:[%s116 + $0x450] sm:$0xff]
        %v276 = vld [vmem:[%s116 + $0x458] sm:$0xff]
        %v277 = vld [vmem:[%s116 + $0x460] sm:$0xff]
        %v278 = vld [vmem:[%s116 + $0x468] sm:$0xff]
        %v279 = vld [vmem:[%s116 + $0x470] sm:$0xff]
        %v280 = vld [vmem:[%s116 + $0x478] sm:$0xff]
        %v281 = vld [vmem:[%s116 + $0x480] sm:$0xff]
        %v282 = vld [vmem:[%s116 + $0x488] sm:$0xff]
        %v283 = vld [vmem:[%s116 + $0x490] sm:$0xff]
        %v284 = vld [vmem:[%s116 + $0x498] sm:$0xff]
        %v285 = vld [vmem:[%s116 + $0x4a0] sm:$0xff]
        %v286 = vld [vmem:[%s116 + $0x4a8] sm:$0xff]
        %v287 = vld [vmem:[%s116 + $0x4b0] sm:$0xff]
        %v288 = vld [vmem:[%s116 + $0x4b8] sm:$0xff]
        %v289 = vld [vmem:[%s116 + $0x4c0] sm:$0xff]
        %v290 = vld [vmem:[%s116 + $0x4c8] sm:$0xff]
        %v291 = vld [vmem:[%s116 + $0x4d0] sm:$0xff]
        %v292 = vld [vmem:[%s116 + $0x4d8] sm:$0xff]
        %v293 = vld [vmem:[%s116 + $0x4e0] sm:$0xff]
        %v294 = vld [vmem:[%s116 + $0x4e8] sm:$0xff]
        %v295 = vld [vmem:[%s116 + $0x4f0] sm:$0xff]
        %v296 = vld [vmem:[%s116 + $0x4f8] sm:$0xff]
        %v297 = vld [vmem:[%s116 + $0x500] sm:$0xff]
        %v298 = vld [vmem:[%s116 + $0x508] sm:$0xff]
        %v299 = vld [vmem:[%s116 + $0x510] sm:$0xff]
        %v300 = vld [vmem:[%s116 + $0x518] sm:$0xff]
        %v301 = vld [vmem:[%s116 + $0x520] sm:$0xff]
        %v302 = vld [vmem:[%s116 + $0x528] sm:$0xff]
        %v303 = vld [vmem:[%s116 + $0x530] sm:$0xff]
        %v304 = vld [vmem:[%s116 + $0x538] sm:$0xff]
        %v305 = vld [vmem:[%s116 + $0x540] sm:$0xff]
        %v306 = vld [vmem:[%s116 + $0x548] sm:$0xff]
        %v307 = vld [vmem:[%s116 + $0x550] sm:$0xff]
        %v308 = vld [vmem:[%s116 + $0x558] sm:$0xff]
        %v309 = vld [vmem:[%s116 + $0x560] sm:$0xff]
        %v310 = vld [vmem:[%s116 + $0x568] sm:$0xff]
        %v311 = vld [vmem:[%s116 + $0x570] sm:$0xff]
        %v312 = vld [vmem:[%s116 + $0x578] sm:$0xff]
        %v313 = vld [vmem:[%s116 + $0x580] sm:$0xff]
        %v314 = vld [vmem:[%s116 + $0x588] sm:$0xff]
        %v315 = vld [vmem:[%s116 + $0x590] sm:$0xff]
        %v316 = vld [vmem:[%s116 + $0x598] sm:$0xff]
        %v317 = vld [vmem:[%s116 + $0x5a0] sm:$0xff]
        %v318 = vld [vmem:[%s116 + $0x5a8] sm:$0xff]
        %v319 = vld [vmem:[%s116 + $0x5b0] sm:$0xff]
        %v320 = vld [vmem:[%s116 + $0x5b8] sm:$0xff]
        %v321 = vld [vmem:[%s116 + $0x5c0] sm:$0xff]
        %v322 = vld [vmem:[%s116 + $0x5c8] sm:$0xff]
        %v323 = vld [vmem:[%s116 + $0x5d0] sm:$0xff]
        %v324 = vld [vmem:[%s116 + $0x5d8] sm:$0xff]
        %v325 = vld [vmem:[%s116 + $0x5e0] sm:$0xff]
        %v326 = vld [vmem:[%s116 + $0x5e8] sm:$0xff]
        %v327 = vld [vmem:[%s116 + $0x5f0] sm:$0xff]
        %v328 = vld [vmem:[%s116 + $0x5f8] sm:$0xff]
        %v329 = vld [vmem:[%s116 + $0x600] sm:$0xff]
        %v330 = vld [vmem:[%s116 + $0x608] sm:$0xff]
        %v331 = vld [vmem:[%s116 + $0x610] sm:$0xff]
        %v332 = vld [vmem:[%s116 + $0x618] sm:$0xff]
        %v333 = vld [vmem:[%s116 + $0x620] sm:$0xff]
        %v334 = vld [vmem:[%s116 + $0x628] sm:$0xff]
        %v335 = vld [vmem:[%s116 + $0x630] sm:$0xff]
        %v336 = vld [vmem:[%s116 + $0x638] sm:$0xff]
        %v337 = vld [vmem:[%s116 + $0x640] sm:$0xff]
        %v338 = vld [vmem:[%s116 + $0x648] sm:$0xff]
        %v339 = vld [vmem:[%s116 + $0x650] sm:$0xff]
        %v340 = vld [vmem:[%s116 + $0x658] sm:$0xff]
        %v341 = vld [vmem:[%s116 + $0x660] sm:$0xff]
        %v342 = vld [vmem:[%s116 + $0x668] sm:$0xff]
        %v343 = vld [vmem:[%s116 + $0x670] sm:$0xff]
        %v344 = vld [vmem:[%s116 + $0x678] sm:$0xff]
        %v345 = vld [vmem:[%s116 + $0x680] sm:$0xff]
        %v346 = vld [vmem:[%s116 + $0x688] sm:$0xff]
        %v347 = vld [vmem:[%s116 + $0x690] sm:$0xff]
        %v348 = vld [vmem:[%s116 + $0x698] sm:$0xff]
        %v349 = vld [vmem:[%s116 + $0x6a0] sm:$0xff]
        %v350 = vld [vmem:[%s116 + $0x6a8] sm:$0xff]
        %v351 = vld [vmem:[%s116 + $0x6b0] sm:$0xff]
        %v352 = vld [vmem:[%s116 + $0x6b8] sm:$0xff]
        %v353 = vld [vmem:[%s116 + $0x6c0] sm:$0xff]
        %v354 = vld [vmem:[%s116 + $0x6c8] sm:$0xff]
        %v355 = vld [vmem:[%s116 + $0x6d0] sm:$0xff]
        %v356 = vld [vmem:[%s116 + $0x6d8] sm:$0xff]
        %v357 = vld [vmem:[%s116 + $0x6e0] sm:$0xff]
        %v358 = vld [vmem:[%s116 + $0x6e8] sm:$0xff]
        %v359 = vld [vmem:[%s116 + $0x6f0] sm:$0xff]
        %v360 = vld [vmem:[%s116 + $0x6f8] sm:$0xff]
        %v361 = vld [vmem:[%s116 + $0x700] sm:$0xff]
        %v362 = vld [vmem:[%s116 + $0x708] sm:$0xff]
        %v363 = vld [vmem:[%s116 + $0x710] sm:$0xff]
        %v364 = vld [vmem:[%s116 + $0x718] sm:$0xff]
        %v365 = vld [vmem:[%s116 + $0x720] sm:$0xff]
        %v366 = vld [vmem:[%s116 + $0x728] sm:$0xff]
        %v367 = vld [vmem:[%s116 + $0x730] sm:$0xff]
        %v368 = vld [vmem:[%s116 + $0x738] sm:$0xff]
        %v369 = vld [vmem:[%s116 + $0x740] sm:$0xff]
        %v370 = vld [vmem:[%s116 + $0x748] sm:$0xff]
        %v371 = vld [vmem:[%s116 + $0x750] sm:$0xff]
        %v372 = vld [vmem:[%s116 + $0x758] sm:$0xff]
        %v373 = vld [vmem:[%s116 + $0x760] sm:$0xff]
        %v374 = vld [vmem:[%s116 + $0x768] sm:$0xff]
        %v375 = vld [vmem:[%s116 + $0x770] sm:$0xff]
        %v376 = vld [vmem:[%s116 + $0x778] sm:$0xff]
        %v377 = vld [vmem:[%s116 + $0x780] sm:$0xff]
        %v378 = vld [vmem:[%s116 + $0x788] sm:$0xff]
        %v379 = vld [vmem:[%s116 + $0x790] sm:$0xff]
        %v380 = vld [vmem:[%s116 + $0x798] sm:$0xff]
        %v381 = vld [vmem:[%s116 + $0x7a0] sm:$0xff]
        %v382 = vld [vmem:[%s116 + $0x7a8] sm:$0xff]
        %v383 = vld [vmem:[%s116 + $0x7b0] sm:$0xff]
        %v384 = vld [vmem:[%s116 + $0x7b8] sm:$0xff]
        %v385 = vld [vmem:[%s116 + $0x7c0] sm:$0xff]
        %v386 = vld [vmem:[%s116 + $0x7c8] sm:$0xff]
        %v387 = vld [vmem:[%s116 + $0x7d0] sm:$0xff]
        %v388 = vld [vmem:[%s116 + $0x7d8] sm:$0xff]
        %v389 = vld [vmem:[%s116 + $0x7e0] sm:$0xff]
        %v390 = vld [vmem:[%s116 + $0x7e8] sm:$0xff]
        %v391 = vld [vmem:[%s116 + $0x7f0] sm:$0xff]
        %v392 = vld [vmem:[%s116 + $0x7f8] sm:$0xff]
        %v393 = vld [vmem:[%s116 + $0x800] sm:$0xff]
        %v394 = vld [vmem:[%s116 + $0x808] sm:$0xff]
        %v395 = vld [vmem:[%s116 + $0x810] sm:$0xff]
        %v396 = vld [vmem:[%s116 + $0x818] sm:$0xff]
        %v397 = vld [vmem:[%s116 + $0x820] sm:$0xff]
        %v398 = vld [vmem:[%s116 + $0x828] sm:$0xff]
        %v399 = vld [vmem:[%s116 + $0x830] sm:$0xff]
        %v400 = vld [vmem:[%s116 + $0x838] sm:$0xff]
        %v401 = vld [vmem:[%s116 + $0x840] sm:$0xff]
        %v402 = vld [vmem:[%s116 + $0x848] sm:$0xff]
        %v403 = vld [vmem:[%s116 + $0x850] sm:$0xff]
        %v404 = vld [vmem:[%s116 + $0x858] sm:$0xff]
        %v405 = vld [vmem:[%s116 + $0x860] sm:$0xff]
        %v406 = vld [vmem:[%s116 + $0x868] sm:$0xff]
        %v407 = vld [vmem:[%s116 + $0x870] sm:$0xff]
        %v408 = vld [vmem:[%s116 + $0x878] sm:$0xff]
        %v409 = vld [vmem:[%s116 + $0x880] sm:$0xff]
        %v410 = vld [vmem:[%s116 + $0x888] sm:$0xff]
        %v411 = vld [vmem:[%s116 + $0x890] sm:$0xff]
        %v412 = vld [vmem:[%s116 + $0x898] sm:$0xff]
        %v413 = vld [vmem:[%s116 + $0x8a0] sm:$0xff]
        %v414 = vld [vmem:[%s116 + $0x8a8] sm:$0xff]
        %v415 = vld [vmem:[%s116 + $0x8b0] sm:$0xff]
        %v416 = vld [vmem:[%s116 + $0x8b8] sm:$0xff]
        %v417 = vld [vmem:[%s116 + $0x8c0] sm:$0xff]
        %v418 = vld [vmem:[%s116 + $0x8c8] sm:$0xff]
        %v419 = vld [vmem:[%s116 + $0x8d0] sm:$0xff]
        %v420 = vld [vmem:[%s116 + $0x8d8] sm:$0xff]
        %v421 = vld [vmem:[%s116 + $0x8e0] sm:$0xff]
        %v422 = vld [vmem:[%s116 + $0x8e8] sm:$0xff]
        %v423 = vld [vmem:[%s116 + $0x8f0] sm:$0xff]
        %v424 = vld [vmem:[%s116 + $0x8f8] sm:$0xff]
        %v425 = vld [vmem:[%s116 + $0x900] sm:$0xff]
        %v426 = vld [vmem:[%s116 + $0x908] sm:$0xff]
        %v427 = vld [vmem:[%s116 + $0x910] sm:$0xff]
        %v428 = vld [vmem:[%s116 + $0x918] sm:$0xff]
        %v429 = vld [vmem:[%s116 + $0x920] sm:$0xff]
        %v430 = vld [vmem:[%s116 + $0x928] sm:$0xff]
        %v431 = vld [vmem:[%s116 + $0x930] sm:$0xff]
        %v432 = vld [vmem:[%s116 + $0x938] sm:$0xff]
        %v433 = vld [vmem:[%s116 + $0x940] sm:$0xff]
        %v434 = vld [vmem:[%s116 + $0x948] sm:$0xff]
        %v435 = vld [vmem:[%s116 + $0x950] sm:$0xff]
        %v436 = vld [vmem:[%s116 + $0x958] sm:$0xff]
        %v437 = vld [vmem:[%s116 + $0x960] sm:$0xff]
        %v438 = vld [vmem:[%s116 + $0x968] sm:$0xff]
        %v439 = vld [vmem:[%s116 + $0x970] sm:$0xff]
        %v440 = vld [vmem:[%s116 + $0x978] sm:$0xff]
        %v441 = vld [vmem:[%s116 + $0x980] sm:$0xff]
        %v442 = vld [vmem:[%s116 + $0x988] sm:$0xff]
        %v443 = vld [vmem:[%s116 + $0x990] sm:$0xff]
        %v444 = vld [vmem:[%s116 + $0x998] sm:$0xff]
        %v445 = vld [vmem:[%s116 + $0x9a0] sm:$0xff]
        %v446 = vld [vmem:[%s116 + $0x9a8] sm:$0xff]
        %v447 = vld [vmem:[%s116 + $0x9b0] sm:$0xff]
        %v448 = vld [vmem:[%s116 + $0x9b8] sm:$0xff]
        %v449 = vld [vmem:[%s116 + $0x9c0] sm:$0xff]
        %v450 = vld [vmem:[%s116 + $0x9c8] sm:$0xff]
        %v451 = vld [vmem:[%s116 + $0x9d0] sm:$0xff]
        %v452 = vld [vmem:[%s116 + $0x9d8] sm:$0xff]
        %v453 = vld [vmem:[%s116 + $0x9e0] sm:$0xff]
        %v454 = vld [vmem:[%s116 + $0x9e8] sm:$0xff]
        %v455 = vld [vmem:[%s116 + $0x9f0] sm:$0xff]
        %v456 = vld [vmem:[%s116 + $0x9f8] sm:$0xff]
        %v457 = vld [vmem:[%s116 + $0xa00] sm:$0xff]
        %v458 = vld [vmem:[%s116 + $0xa08] sm:$0xff]
        %v459 = vld [vmem:[%s116 + $0xa10] sm:$0xff]
        %v460 = vld [vmem:[%s116 + $0xa18] sm:$0xff]
        %v461 = vld [vmem:[%s116 + $0xa20] sm:$0xff]
        %v462 = vld [vmem:[%s116 + $0xa28] sm:$0xff]
        %v463 = vld [vmem:[%s116 + $0xa30] sm:$0xff]
        %v464 = vld [vmem:[%s116 + $0xa38] sm:$0xff]
        %v465 = vld [vmem:[%s116 + $0xa40] sm:$0xff]
        %v466 = vld [vmem:[%s116 + $0xa48] sm:$0xff]
        %v467 = vld [vmem:[%s116 + $0xa50] sm:$0xff]
        %v468 = vld [vmem:[%s116 + $0xa58] sm:$0xff]
        %v469 = vld [vmem:[%s116 + $0xa60] sm:$0xff]
        %v470 = vld [vmem:[%s116 + $0xa68] sm:$0xff]
        %v471 = vld [vmem:[%s116 + $0xa70] sm:$0xff]
        %v472 = vld [vmem:[%s116 + $0xa78] sm:$0xff]
        %v473 = vld [vmem:[%s116 + $0xa80] sm:$0xff]
        %v474 = vld [vmem:[%s116 + $0xa88] sm:$0xff]
        %v475 = vld [vmem:[%s116 + $0xa90] sm:$0xff]
        %v476 = vld [vmem:[%s116 + $0xa98] sm:$0xff]
        %v477 = vld [vmem:[%s116 + $0xaa0] sm:$0xff]
        %v478 = vld [vmem:[%s116 + $0xaa8] sm:$0xff]
        %v479 = vld [vmem:[%s116 + $0xab0] sm:$0xff]
        %v480 = vld [vmem:[%s116 + $0xab8] sm:$0xff]
        %v481 = vld [vmem:[%s116 + $0xac0] sm:$0xff]
        %v482 = vld [vmem:[%s116 + $0xac8] sm:$0xff]
        %v483 = vld [vmem:[%s116 + $0xad0] sm:$0xff]
        %v484 = vld [vmem:[%s116 + $0xad8] sm:$0xff]
        %v485 = vld [vmem:[%s116 + $0xae0] sm:$0xff]
        %v486 = vld [vmem:[%s116 + $0xae8] sm:$0xff]
        %v487 = vld [vmem:[%s116 + $0xaf0] sm:$0xff]
        %v488 = vld [vmem:[%s116 + $0xaf8] sm:$0xff]
        %v489 = vld [vmem:[%s116 + $0xb00] sm:$0xff]
        %v490 = vld [vmem:[%s116 + $0xb08] sm:$0xff]
        %v491 = vld [vmem:[%s116 + $0xb10] sm:$0xff]
        %v492 = vld [vmem:[%s116 + $0xb18] sm:$0xff]
        %v493 = vld [vmem:[%s116 + $0xb20] sm:$0xff]
        %v494 = vld [vmem:[%s116 + $0xb28] sm:$0xff]
        %v495 = vld [vmem:[%s116 + $0xb30] sm:$0xff]
        %v496 = vld [vmem:[%s116 + $0xb38] sm:$0xff]
        %v497 = vld [vmem:[%s116 + $0xb40] sm:$0xff]
        %v498 = vld [vmem:[%s116 + $0xb48] sm:$0xff]
        %v499 = vld [vmem:[%s116 + $0xb50] sm:$0xff]
        %v500 = vld [vmem:[%s116 + $0xb58] sm:$0xff]
        %v501 = vld [vmem:[%s116 + $0xb60] sm:$0xff]
        %v502 = vld [vmem:[%s116 + $0xb68] sm:$0xff]
        %v503 = vld [vmem:[%s116 + $0xb70] sm:$0xff]
        %v504 = vld [vmem:[%s116 + $0xb78] sm:$0xff]
        %v505 = vld [vmem:[%s116 + $0xb80] sm:$0xff]
        %v506 = vld [vmem:[%s116 + $0xb88] sm:$0xff]
        %v507 = vld [vmem:[%s116 + $0xb90] sm:$0xff]
        %v508 = vld [vmem:[%s116 + $0xb98] sm:$0xff]
        %v509 = vld [vmem:[%s116 + $0xba0] sm:$0xff]
        %v510 = vld [vmem:[%s116 + $0xba8] sm:$0xff]
        %v511 = vld [vmem:[%s116 + $0xbb0] sm:$0xff]
        %v512 = vld [vmem:[%s116 + $0xbb8] sm:$0xff]
        %v513 = vld [vmem:[%s116 + $0xbc0] sm:$0xff]
        %v514 = vld [vmem:[%s116 + $0xbc8] sm:$0xff]
        %v515 = vld [vmem:[%s116 + $0xbd0] sm:$0xff]
        %v516 = vld [vmem:[%s116 + $0xbd8] sm:$0xff]
        %v517 = vld [vmem:[%s116 + $0xbe0] sm:$0xff]
        %v518 = vld [vmem:[%s116 + $0xbe8] sm:$0xff]
        %v519 = vld [vmem:[%s116 + $0xbf0] sm:$0xff]
        %v520 = vld [vmem:[%s116 + $0xbf8] sm:$0xff]
        %v521 = vld [vmem:[%s116 + $0xc00] sm:$0xff]
        %v522 = vld [vmem:[%s116 + $0xc08] sm:$0xff]
        %v523 = vld [vmem:[%s116 + $0xc10] sm:$0xff]
        %v524 = vld [vmem:[%s116 + $0xc18] sm:$0xff]
        %v525 = vld [vmem:[%s116 + $0xc20] sm:$0xff]
        %v526 = vld [vmem:[%s116 + $0xc28] sm:$0xff]
        %v527 = vld [vmem:[%s116 + $0xc30] sm:$0xff]
        %v528 = vld [vmem:[%s116 + $0xc38] sm:$0xff]
        %v529 = vld [vmem:[%s116 + $0xc40] sm:$0xff]
        %v530 = vld [vmem:[%s116 + $0xc48] sm:$0xff]
        %v531 = vld [vmem:[%s116 + $0xc50] sm:$0xff]
        %v532 = vld [vmem:[%s116 + $0xc58] sm:$0xff]
        %v533 = vld [vmem:[%s116 + $0xc60] sm:$0xff]
        %v534 = vld [vmem:[%s116 + $0xc68] sm:$0xff]
        %v535 = vld [vmem:[%s116 + $0xc70] sm:$0xff]
        %v536 = vld [vmem:[%s116 + $0xc78] sm:$0xff]
        %v537 = vld [vmem:[%s116 + $0xc80] sm:$0xff]
        %v538 = vld [vmem:[%s116 + $0xc88] sm:$0xff]
        %v539 = vld [vmem:[%s116 + $0xc90] sm:$0xff]
        %v540 = vld [vmem:[%s116 + $0xc98] sm:$0xff]
        %v541 = vld [vmem:[%s116 + $0xca0] sm:$0xff]
        %v542 = vld [vmem:[%s116 + $0xca8] sm:$0xff]
        %v543 = vld [vmem:[%s116 + $0xcb0] sm:$0xff]
        %v544 = vld [vmem:[%s116 + $0xcb8] sm:$0xff]
        %v545 = vld [vmem:[%s116 + $0xcc0] sm:$0xff]
        %v546 = vld [vmem:[%s116 + $0xcc8] sm:$0xff]
        %v547 = vld [vmem:[%s116 + $0xcd0] sm:$0xff]
        %v548 = vld [vmem:[%s116 + $0xcd8] sm:$0xff]
        %v549 = vld [vmem:[%s116 + $0xce0] sm:$0xff]
        %v550 = vld [vmem:[%s116 + $0xce8] sm:$0xff]
        %v551 = vld [vmem:[%s116 + $0xcf0] sm:$0xff]
        %v552 = vld [vmem:[%s116 + $0xcf8] sm:$0xff]
        %v553 = vld [vmem:[%s116 + $0xd00] sm:$0xff]
        %v554 = vld [vmem:[%s116 + $0xd08] sm:$0xff]
        %v555 = vld [vmem:[%s116 + $0xd10] sm:$0xff]
        %v556 = vld [vmem:[%s116 + $0xd18] sm:$0xff]
        %v557 = vld [vmem:[%s116 + $0xd20] sm:$0xff]
        %v558 = vld [vmem:[%s116 + $0xd28] sm:$0xff]
        %v559 = vld [vmem:[%s116 + $0xd30] sm:$0xff]
        %v560 = vld [vmem:[%s116 + $0xd38] sm:$0xff]
        %v561 = vld [vmem:[%s116 + $0xd40] sm:$0xff]
        %v562 = vld [vmem:[%s116 + $0xd48] sm:$0xff]
        %v563 = vld [vmem:[%s116 + $0xd50] sm:$0xff]
        %v564 = vld [vmem:[%s116 + $0xd58] sm:$0xff]
        %v565 = vld [vmem:[%s116 + $0xd60] sm:$0xff]
        %v566 = vld [vmem:[%s116 + $0xd68] sm:$0xff]
        %v567 = vld [vmem:[%s116 + $0xd70] sm:$0xff]
        %v568 = vld [vmem:[%s116 + $0xd78] sm:$0xff]
        %v569 = vld [vmem:[%s116 + $0xd80] sm:$0xff]
        %v570 = vld [vmem:[%s116 + $0xd88] sm:$0xff]
        %v571 = vld [vmem:[%s116 + $0xd90] sm:$0xff]
        %v572 = vld [vmem:[%s116 + $0xd98] sm:$0xff]
        %v573 = vld [vmem:[%s116 + $0xda0] sm:$0xff]
        %v574 = vld [vmem:[%s116 + $0xda8] sm:$0xff]
        %v575 = vld [vmem:[%s116 + $0xdb0] sm:$0xff]
        %v576 = vld [vmem:[%s116 + $0xdb8] sm:$0xff]
        %v577 = vld [vmem:[%s116 + $0xdc0] sm:$0xff]
        %v578 = vld [vmem:[%s116 + $0xdc8] sm:$0xff]
        %v579 = vld [vmem:[%s116 + $0xdd0] sm:$0xff]
        %v580 = vld [vmem:[%s116 + $0xdd8] sm:$0xff]
        %v581 = vld [vmem:[%s116 + $0xde0] sm:$0xff]
        %v582 = vld [vmem:[%s116 + $0xde8] sm:$0xff]
        %v583 = vld [vmem:[%s116 + $0xdf0] sm:$0xff]
        %v584 = vld [vmem:[%s116 + $0xdf8] sm:$0xff]
        %v585 = vld [vmem:[%s116 + $0xe00] sm:$0xff]
        %v586 = vld [vmem:[%s116 + $0xe08] sm:$0xff]
        %v587 = vld [vmem:[%s116 + $0xe10] sm:$0xff]
        %v588 = vld [vmem:[%s116 + $0xe18] sm:$0xff]
        %v589 = vld [vmem:[%s116 + $0xe20] sm:$0xff]
        %v590 = vld [vmem:[%s116 + $0xe28] sm:$0xff]
        %v591 = vld [vmem:[%s116 + $0xe30] sm:$0xff]
        %v592 = vld [vmem:[%s116 + $0xe38] sm:$0xff]
        %v593 = vld [vmem:[%s116 + $0xe40] sm:$0xff]
        %v594 = vld [vmem:[%s116 + $0xe48] sm:$0xff]
        %v595 = vld [vmem:[%s116 + $0xe50] sm:$0xff]
        %v596 = vld [vmem:[%s116 + $0xe58] sm:$0xff]
        %v597 = vld [vmem:[%s116 + $0xe60] sm:$0xff]
        %v598 = vld [vmem:[%s116 + $0xe68] sm:$0xff]
        %v599 = vld [vmem:[%s116 + $0xe70] sm:$0xff]
        %v600 = vld [vmem:[%s116 + $0xe78] sm:$0xff]
        %v601 = vld [vmem:[%s116 + $0xe80] sm:$0xff]
        %v602 = vld [vmem:[%s116 + $0xe88] sm:$0xff]
        %v603 = vld [vmem:[%s116 + $0xe90] sm:$0xff]
        %v604 = vld [vmem:[%s116 + $0xe98] sm:$0xff]
        %v605 = vld [vmem:[%s116 + $0xea0] sm:$0xff]
        %v606 = vld [vmem:[%s116 + $0xea8] sm:$0xff]
        %v607 = vld [vmem:[%s116 + $0xeb0] sm:$0xff]
        %v608 = vld [vmem:[%s116 + $0xeb8] sm:$0xff]
        %v609 = vld [vmem:[%s116 + $0xec0] sm:$0xff]
        %v610 = vld [vmem:[%s116 + $0xec8] sm:$0xff]
        %v611 = vld [vmem:[%s116 + $0xed0] sm:$0xff]
        %v612 = vld [vmem:[%s116 + $0xed8] sm:$0xff]
        %v613 = vld [vmem:[%s116 + $0xee0] sm:$0xff]
        %v614 = vld [vmem:[%s116 + $0xee8] sm:$0xff]
        %v615 = vld [vmem:[%s116 + $0xef0] sm:$0xff]
        %v616 = vld [vmem:[%s116 + $0xef8] sm:$0xff]
        %v617 = vld [vmem:[%s116 + $0xf00] sm:$0xff]
        %v618 = vld [vmem:[%s116 + $0xf08] sm:$0xff]
        %v619 = vld [vmem:[%s116 + $0xf10] sm:$0xff]
        %v620 = vld [vmem:[%s116 + $0xf18] sm:$0xff]
        %v621 = vld [vmem:[%s116 + $0xf20] sm:$0xff]
        %v622 = vld [vmem:[%s116 + $0xf28] sm:$0xff]
        %v623 = vld [vmem:[%s116 + $0xf30] sm:$0xff]
        %v624 = vld [vmem:[%s116 + $0xf38] sm:$0xff]
        %v625 = vld [vmem:[%s116 + $0xf40] sm:$0xff]
        %v626 = vld [vmem:[%s116 + $0xf48] sm:$0xff]
        %v627 = vld [vmem:[%s116 + $0xf50] sm:$0xff]
        %v628 = vld [vmem:[%s116 + $0xf58] sm:$0xff]
        %v629 = vld [vmem:[%s116 + $0xf60] sm:$0xff]
        %v630 = vld [vmem:[%s116 + $0xf68] sm:$0xff]
        %v631 = vld [vmem:[%s116 + $0xf70] sm:$0xff]
        %v632 = vld [vmem:[%s116 + $0xf78] sm:$0xff]
        %v633 = vld [vmem:[%s116 + $0xf80] sm:$0xff]
        %v634 = vld [vmem:[%s116 + $0xf88] sm:$0xff]
        %v635 = vld [vmem:[%s116 + $0xf90] sm:$0xff]
        %v636 = vld [vmem:[%s116 + $0xf98] sm:$0xff]
        %v637 = vld [vmem:[%s116 + $0xfa0] sm:$0xff]
        %v638 = vld [vmem:[%s116 + $0xfa8] sm:$0xff]
        %v639 = vld [vmem:[%s116 + $0xfb0] sm:$0xff]
        %v640 = vld [vmem:[%s116 + $0xfb8] sm:$0xff]
        %v641 = vld [vmem:[%s116 + $0xfc0] sm:$0xff]
        %v642 = vld [vmem:[%s116 + $0xfc8] sm:$0xff]
        %v643 = vld [vmem:[%s116 + $0xfd0] sm:$0xff]
        %v644 = vld [vmem:[%s116 + $0xfd8] sm:$0xff]
        %v645 = vld [vmem:[%s116 + $0xfe0] sm:$0xff]
        %v646 = vld [vmem:[%s116 + $0xfe8] sm:$0xff]
        %v647 = vld [vmem:[%s116 + $0xff0] sm:$0xff]
        %v648 = vld [vmem:[%s116 + $0xff8] sm:$0xff]
        %v649 = vmul.f32 %v137, 0.003921569
        %v650 = vmul.f32 %v138, 0.003921569
        %v651 = vmul.f32 %v139, 0.003921569
        %v652 = vmul.f32 %v140, 0.003921569
        %v653 = vmul.f32 %v141, 0.003921569
        %v654 = vmul.f32 %v142, 0.003921569
        %v655 = vmul.f32 %v143, 0.003921569
        %v656 = vmul.f32 %v144, 0.003921569
        %v657 = vmul.f32 %v145, 0.003921569
        %v658 = vmul.f32 %v146, 0.003921569
        %v659 = vmul.f32 %v147, 0.003921569
        %v660 = vmul.f32 %v148, 0.003921569
        %v661 = vmul.f32 %v149, 0.003921569
        %v662 = vmul.f32 %v150, 0.003921569
        %v663 = vmul.f32 %v151, 0.003921569
        %v664 = vmul.f32 %v152, 0.003921569
        %v665 = vmul.f32 %v153, 0.003921569
        %v666 = vmul.f32 %v154, 0.003921569
        %v667 = vmul.f32 %v155, 0.003921569
        %v668 = vmul.f32 %v156, 0.003921569
        %v669 = vmul.f32 %v157, 0.003921569
        %v670 = vmul.f32 %v158, 0.003921569
        %v671 = vmul.f32 %v159, 0.003921569
        %v672 = vmul.f32 %v160, 0.003921569
        %v673 = vmul.f32 %v161, 0.003921569
        %v674 = vmul.f32 %v162, 0.003921569
        %v675 = vmul.f32 %v163, 0.003921569
        %v676 = vmul.f32 %v164, 0.003921569
        %v677 = vmul.f32 %v165, 0.003921569
        %v678 = vmul.f32 %v166, 0.003921569
        %v679 = vmul.f32 %v167, 0.003921569
        %v680 = vmul.f32 %v168, 0.003921569
        %v681 = vmul.f32 %v169, 0.003921569
        %v682 = vmul.f32 %v170, 0.003921569
        %v683 = vmul.f32 %v171, 0.003921569
        %v684 = vmul.f32 %v172, 0.003921569
        %v685 = vmul.f32 %v173, 0.003921569
        %v686 = vmul.f32 %v174, 0.003921569
        %v687 = vmul.f32 %v175, 0.003921569
        %v688 = vmul.f32 %v176, 0.003921569
        %v689 = vmul.f32 %v177, 0.003921569
        %v690 = vmul.f32 %v178, 0.003921569
        %v691 = vmul.f32 %v179, 0.003921569
        %v692 = vmul.f32 %v180, 0.003921569
        %v693 = vmul.f32 %v181, 0.003921569
        %v694 = vmul.f32 %v182, 0.003921569
        %v695 = vmul.f32 %v183, 0.003921569
        %v696 = vmul.f32 %v184, 0.003921569
        %v697 = vmul.f32 %v185, 0.003921569
        %v698 = vmul.f32 %v186, 0.003921569
        %v699 = vmul.f32 %v187, 0.003921569
        %v700 = vmul.f32 %v188, 0.003921569
        %v701 = vmul.f32 %v189, 0.003921569
        %v702 = vmul.f32 %v190, 0.003921569
        %v703 = vmul.f32 %v191, 0.003921569
        %v704 = vmul.f32 %v192, 0.003921569
        %v705 = vmul.f32 %v193, 0.003921569
        %v706 = vmul.f32 %v194, 0.003921569
        %v707 = vmul.f32 %v195, 0.003921569
        %v708 = vmul.f32 %v196, 0.003921569
        %v709 = vmul.f32 %v197, 0.003921569
        %v710 = vmul.f32 %v198, 0.003921569
        %v711 = vmul.f32 %v199, 0.003921569
        %v712 = vmul.f32 %v200, 0.003921569
        %v713 = vmul.f32 %v201, 0.003921569
        %v714 = vmul.f32 %v202, 0.003921569
        %v715 = vmul.f32 %v203, 0.003921569
        %v716 = vmul.f32 %v204, 0.003921569
        %v717 = vmul.f32 %v205, 0.003921569
        %v718 = vmul.f32 %v206, 0.003921569
        %v719 = vmul.f32 %v207, 0.003921569
        %v720 = vmul.f32 %v208, 0.003921569
        %v721 = vmul.f32 %v209, 0.003921569
        %v722 = vmul.f32 %v210, 0.003921569
        %v723 = vmul.f32 %v211, 0.003921569
        %v724 = vmul.f32 %v212, 0.003921569
        %v725 = vmul.f32 %v213, 0.003921569
        %v726 = vmul.f32 %v214, 0.003921569
        %v727 = vmul.f32 %v215, 0.003921569
        %v728 = vmul.f32 %v216, 0.003921569
        %v729 = vmul.f32 %v217, 0.003921569
        %v730 = vmul.f32 %v218, 0.003921569
        %v731 = vmul.f32 %v219, 0.003921569
        %v732 = vmul.f32 %v220, 0.003921569
        %v733 = vmul.f32 %v221, 0.003921569
        %v734 = vmul.f32 %v222, 0.003921569
        %v735 = vmul.f32 %v223, 0.003921569
        %v736 = vmul.f32 %v224, 0.003921569
        %v737 = vmul.f32 %v225, 0.003921569
        %v738 = vmul.f32 %v226, 0.003921569
        %v739 = vmul.f32 %v227, 0.003921569
        %v740 = vmul.f32 %v228, 0.003921569
        %v741 = vmul.f32 %v229, 0.003921569
        %v742 = vmul.f32 %v230, 0.003921569
        %v743 = vmul.f32 %v231, 0.003921569
        %v744 = vmul.f32 %v232, 0.003921569
        %v745 = vmul.f32 %v233, 0.003921569
        %v746 = vmul.f32 %v234, 0.003921569
        %v747 = vmul.f32 %v235, 0.003921569
        %v748 = vmul.f32 %v236, 0.003921569
        %v749 = vmul.f32 %v237, 0.003921569
        %v750 = vmul.f32 %v238, 0.003921569
        %v751 = vmul.f32 %v239, 0.003921569
        %v752 = vmul.f32 %v240, 0.003921569
        %v753 = vmul.f32 %v241, 0.003921569
        %v754 = vmul.f32 %v242, 0.003921569
        %v755 = vmul.f32 %v243, 0.003921569
        %v756 = vmul.f32 %v244, 0.003921569
        %v757 = vmul.f32 %v245, 0.003921569
        %v758 = vmul.f32 %v246, 0.003921569
        %v759 = vmul.f32 %v247, 0.003921569
        %v760 = vmul.f32 %v248, 0.003921569
        %v761 = vmul.f32 %v249, 0.003921569
        %v762 = vmul.f32 %v250, 0.003921569
        %v763 = vmul.f32 %v251, 0.003921569
        %v764 = vmul.f32 %v252, 0.003921569
        %v765 = vmul.f32 %v253, 0.003921569
        %v766 = vmul.f32 %v254, 0.003921569
        %v767 = vmul.f32 %v255, 0.003921569
        %v768 = vmul.f32 %v256, 0.003921569
        %v769 = vmul.f32 %v257, 0.003921569
        %v770 = vmul.f32 %v258, 0.003921569
        %v771 = vmul.f32 %v259, 0.003921569
        %v772 = vmul.f32 %v260, 0.003921569
        %v773 = vmul.f32 %v261, 0.003921569
        %v774 = vmul.f32 %v262, 0.003921569
        %v775 = vmul.f32 %v263, 0.003921569
        %v776 = vmul.f32 %v264, 0.003921569
        %v777 = vmul.f32 %v265, 0.003921569
        %v778 = vmul.f32 %v266, 0.003921569
        %v779 = vmul.f32 %v267, 0.003921569
        %v780 = vmul.f32 %v268, 0.003921569
        %v781 = vmul.f32 %v269, 0.003921569
        %v782 = vmul.f32 %v270, 0.003921569
        %v783 = vmul.f32 %v271, 0.003921569
        %v784 = vmul.f32 %v272, 0.003921569
        %v785 = vmul.f32 %v273, 0.003921569
        %v786 = vmul.f32 %v274, 0.003921569
        %v787 = vmul.f32 %v275, 0.003921569
        %v788 = vmul.f32 %v276, 0.003921569
        %v789 = vmul.f32 %v277, 0.003921569
        %v790 = vmul.f32 %v278, 0.003921569
        %v791 = vmul.f32 %v279, 0.003921569
        %v792 = vmul.f32 %v280, 0.003921569
        %v793 = vmul.f32 %v281, 0.003921569
        %v794 = vmul.f32 %v282, 0.003921569
        %v795 = vmul.f32 %v283, 0.003921569
        %v796 = vmul.f32 %v284, 0.003921569
        %v797 = vmul.f32 %v285, 0.003921569
        %v798 = vmul.f32 %v286, 0.003921569
        %v799 = vmul.f32 %v287, 0.003921569
        %v800 = vmul.f32 %v288, 0.003921569
        %v801 = vmul.f32 %v289, 0.003921569
        %v802 = vmul.f32 %v290, 0.003921569
        %v803 = vmul.f32 %v291, 0.003921569
        %v804 = vmul.f32 %v292, 0.003921569
        %v805 = vmul.f32 %v293, 0.003921569
        %v806 = vmul.f32 %v294, 0.003921569
        %v807 = vmul.f32 %v295, 0.003921569
        %v808 = vmul.f32 %v296, 0.003921569
        %v809 = vmul.f32 %v297, 0.003921569
        %v810 = vmul.f32 %v298, 0.003921569
        %v811 = vmul.f32 %v299, 0.003921569
        %v812 = vmul.f32 %v300, 0.003921569
        %v813 = vmul.f32 %v301, 0.003921569
        %v814 = vmul.f32 %v302, 0.003921569
        %v815 = vmul.f32 %v303, 0.003921569
        %v816 = vmul.f32 %v304, 0.003921569
        %v817 = vmul.f32 %v305, 0.003921569
        %v818 = vmul.f32 %v306, 0.003921569
        %v819 = vmul.f32 %v307, 0.003921569
        %v820 = vmul.f32 %v308, 0.003921569
        %v821 = vmul.f32 %v309, 0.003921569
        %v822 = vmul.f32 %v310, 0.003921569
        %v823 = vmul.f32 %v311, 0.003921569
        %v824 = vmul.f32 %v312, 0.003921569
        %v825 = vmul.f32 %v313, 0.003921569
        %v826 = vmul.f32 %v314, 0.003921569
        %v827 = vmul.f32 %v315, 0.003921569
        %v828 = vmul.f32 %v316, 0.003921569
        %v829 = vmul.f32 %v317, 0.003921569
        %v830 = vmul.f32 %v318, 0.003921569
        %v831 = vmul.f32 %v319, 0.003921569
        %v832 = vmul.f32 %v320, 0.003921569
        %v833 = vmul.f32 %v321, 0.003921569
        %v834 = vmul.f32 %v322, 0.003921569
        %v835 = vmul.f32 %v323, 0.003921569
        %v836 = vmul.f32 %v324, 0.003921569
        %v837 = vmul.f32 %v325, 0.003921569
        %v838 = vmul.f32 %v326, 0.003921569
        %v839 = vmul.f32 %v327, 0.003921569
        %v840 = vmul.f32 %v328, 0.003921569
        %v841 = vmul.f32 %v329, 0.003921569
        %v842 = vmul.f32 %v330, 0.003921569
        %v843 = vmul.f32 %v331, 0.003921569
        %v844 = vmul.f32 %v332, 0.003921569
        %v845 = vmul.f32 %v333, 0.003921569
        %v846 = vmul.f32 %v334, 0.003921569
        %v847 = vmul.f32 %v335, 0.003921569
        %v848 = vmul.f32 %v336, 0.003921569
        %v849 = vmul.f32 %v337, 0.003921569
        %v850 = vmul.f32 %v338, 0.003921569
        %v851 = vmul.f32 %v339, 0.003921569
        %v852 = vmul.f32 %v340, 0.003921569
        %v853 = vmul.f32 %v341, 0.003921569
        %v854 = vmul.f32 %v342, 0.003921569
        %v855 = vmul.f32 %v343, 0.003921569
        %v856 = vmul.f32 %v344, 0.003921569
        %v857 = vmul.f32 %v345, 0.003921569
        %v858 = vmul.f32 %v346, 0.003921569
        %v859 = vmul.f32 %v347, 0.003921569
        %v860 = vmul.f32 %v348, 0.003921569
        %v861 = vmul.f32 %v349, 0.003921569
        %v862 = vmul.f32 %v350, 0.003921569
        %v863 = vmul.f32 %v351, 0.003921569
        %v864 = vmul.f32 %v352, 0.003921569
        %v865 = vmul.f32 %v353, 0.003921569
        %v866 = vmul.f32 %v354, 0.003921569
        %v867 = vmul.f32 %v355, 0.003921569
        %v868 = vmul.f32 %v356, 0.003921569
        %v869 = vmul.f32 %v357, 0.003921569
        %v870 = vmul.f32 %v358, 0.003921569
        %v871 = vmul.f32 %v359, 0.003921569
        %v872 = vmul.f32 %v360, 0.003921569
        %v873 = vmul.f32 %v361, 0.003921569
        %v874 = vmul.f32 %v362, 0.003921569
        %v875 = vmul.f32 %v363, 0.003921569
        %v876 = vmul.f32 %v364, 0.003921569
        %v877 = vmul.f32 %v365, 0.003921569
        %v878 = vmul.f32 %v366, 0.003921569
        %v879 = vmul.f32 %v367, 0.003921569
        %v880 = vmul.f32 %v368, 0.003921569
        %v881 = vmul.f32 %v369, 0.003921569
        %v882 = vmul.f32 %v370, 0.003921569
        %v883 = vmul.f32 %v371, 0.003921569
        %v884 = vmul.f32 %v372, 0.003921569
        %v885 = vmul.f32 %v373, 0.003921569
        %v886 = vmul.f32 %v374, 0.003921569
        %v887 = vmul.f32 %v375, 0.003921569
        %v888 = vmul.f32 %v376, 0.003921569
        %v889 = vmul.f32 %v377, 0.003921569
        %v890 = vmul.f32 %v378, 0.003921569
        %v891 = vmul.f32 %v379, 0.003921569
        %v892 = vmul.f32 %v380, 0.003921569
        %v893 = vmul.f32 %v381, 0.003921569
        %v894 = vmul.f32 %v382, 0.003921569
        %v895 = vmul.f32 %v383, 0.003921569
        %v896 = vmul.f32 %v384, 0.003921569
        %v897 = vmul.f32 %v385, 0.003921569
        %v898 = vmul.f32 %v386, 0.003921569
        %v899 = vmul.f32 %v387, 0.003921569
        %v900 = vmul.f32 %v388, 0.003921569
        %v901 = vmul.f32 %v389, 0.003921569
        %v902 = vmul.f32 %v390, 0.003921569
        %v903 = vmul.f32 %v391, 0.003921569
        %v904 = vmul.f32 %v392, 0.003921569
        %v905 = vmul.f32 %v393, 0.003921569
        %v906 = vmul.f32 %v394, 0.003921569
        %v907 = vmul.f32 %v395, 0.003921569
        %v908 = vmul.f32 %v396, 0.003921569
        %v909 = vmul.f32 %v397, 0.003921569
        %v910 = vmul.f32 %v398, 0.003921569
        %v911 = vmul.f32 %v399, 0.003921569
        %v912 = vmul.f32 %v400, 0.003921569
        %v913 = vmul.f32 %v401, 0.003921569
        %v914 = vmul.f32 %v402, 0.003921569
        %v915 = vmul.f32 %v403, 0.003921569
        %v916 = vmul.f32 %v404, 0.003921569
        %v917 = vmul.f32 %v405, 0.003921569
        %v918 = vmul.f32 %v406, 0.003921569
        %v919 = vmul.f32 %v407, 0.003921569
        %v920 = vmul.f32 %v408, 0.003921569
        %v921 = vmul.f32 %v409, 0.003921569
        %v922 = vmul.f32 %v410, 0.003921569
        %v923 = vmul.f32 %v411, 0.003921569
        %v924 = vmul.f32 %v412, 0.003921569
        %v925 = vmul.f32 %v413, 0.003921569
        %v926 = vmul.f32 %v414, 0.003921569
        %v927 = vmul.f32 %v415, 0.003921569
        %v928 = vmul.f32 %v416, 0.003921569
        %v929 = vmul.f32 %v417, 0.003921569
        %v930 = vmul.f32 %v418, 0.003921569
        %v931 = vmul.f32 %v419, 0.003921569
        %v932 = vmul.f32 %v420, 0.003921569
        %v933 = vmul.f32 %v421, 0.003921569
        %v934 = vmul.f32 %v422, 0.003921569
        %v935 = vmul.f32 %v423, 0.003921569
        %v936 = vmul.f32 %v424, 0.003921569
        %v937 = vmul.f32 %v425, 0.003921569
        %v938 = vmul.f32 %v426, 0.003921569
        %v939 = vmul.f32 %v427, 0.003921569
        %v940 = vmul.f32 %v428, 0.003921569
        %v941 = vmul.f32 %v429, 0.003921569
        %v942 = vmul.f32 %v430, 0.003921569
        %v943 = vmul.f32 %v431, 0.003921569
        %v944 = vmul.f32 %v432, 0.003921569
        %v945 = vmul.f32 %v433, 0.003921569
        %v946 = vmul.f32 %v434, 0.003921569
        %v947 = vmul.f32 %v435, 0.003921569
        %v948 = vmul.f32 %v436, 0.003921569
        %v949 = vmul.f32 %v437, 0.003921569
        %v950 = vmul.f32 %v438, 0.003921569
        %v951 = vmul.f32 %v439, 0.003921569
        %v952 = vmul.f32 %v440, 0.003921569
        %v953 = vmul.f32 %v441, 0.003921569
        %v954 = vmul.f32 %v442, 0.003921569
        %v955 = vmul.f32 %v443, 0.003921569
        %v956 = vmul.f32 %v444, 0.003921569
        %v957 = vmul.f32 %v445, 0.003921569
        %v958 = vmul.f32 %v446, 0.003921569
        %v959 = vmul.f32 %v447, 0.003921569
        %v960 = vmul.f32 %v448, 0.003921569
        %v961 = vmul.f32 %v449, 0.003921569
        %v962 = vmul.f32 %v450, 0.003921569
        %v963 = vmul.f32 %v451, 0.003921569
        %v964 = vmul.f32 %v452, 0.003921569
        %v965 = vmul.f32 %v453, 0.003921569
        %v966 = vmul.f32 %v454, 0.003921569
        %v967 = vmul.f32 %v455, 0.003921569
        %v968 = vmul.f32 %v456, 0.003921569
        %v969 = vmul.f32 %v457, 0.003921569
        %v970 = vmul.f32 %v458, 0.003921569
        %v971 = vmul.f32 %v459, 0.003921569
        %v972 = vmul.f32 %v460, 0.003921569
        %v973 = vmul.f32 %v461, 0.003921569
        %v974 = vmul.f32 %v462, 0.003921569
        %v975 = vmul.f32 %v463, 0.003921569
        %v976 = vmul.f32 %v464, 0.003921569
        %v977 = vmul.f32 %v465, 0.003921569
        %v978 = vmul.f32 %v466, 0.003921569
        %v979 = vmul.f32 %v467, 0.003921569
        %v980 = vmul.f32 %v468, 0.003921569
        %v981 = vmul.f32 %v469, 0.003921569
        %v982 = vmul.f32 %v470, 0.003921569
        %v983 = vmul.f32 %v471, 0.003921569
        %v984 = vmul.f32 %v472, 0.003921569
        %v985 = vmul.f32 %v473, 0.003921569
        %v986 = vmul.f32 %v474, 0.003921569
        %v987 = vmul.f32 %v475, 0.003921569
        %v988 = vmul.f32 %v476, 0.003921569
        %v989 = vmul.f32 %v477, 0.003921569
        %v990 = vmul.f32 %v478, 0.003921569
        %v991 = vmul.f32 %v479, 0.003921569
        %v992 = vmul.f32 %v480, 0.003921569
        %v993 = vmul.f32 %v481, 0.003921569
        %v994 = vmul.f32 %v482, 0.003921569
        %v995 = vmul.f32 %v483, 0.003921569
        %v996 = vmul.f32 %v484, 0.003921569
        %v997 = vmul.f32 %v485, 0.003921569
        %v998 = vmul.f32 %v486, 0.003921569
        %v999 = vmul.f32 %v487, 0.003921569
        %v1000 = vmul.f32 %v488, 0.003921569
        %v1001 = vmul.f32 %v489, 0.003921569
        %v1002 = vmul.f32 %v490, 0.003921569
        %v1003 = vmul.f32 %v491, 0.003921569
        %v1004 = vmul.f32 %v492, 0.003921569
        %v1005 = vmul.f32 %v493, 0.003921569
        %v1006 = vmul.f32 %v494, 0.003921569
        %v1007 = vmul.f32 %v495, 0.003921569
        %v1008 = vmul.f32 %v496, 0.003921569
        %v1009 = vmul.f32 %v497, 0.003921569
        %v1010 = vmul.f32 %v498, 0.003921569
        %v1011 = vmul.f32 %v499, 0.003921569
        %v1012 = vmul.f32 %v500, 0.003921569
        %v1013 = vmul.f32 %v501, 0.003921569
        %v1014 = vmul.f32 %v502, 0.003921569
        %v1015 = vmul.f32 %v503, 0.003921569
        %v1016 = vmul.f32 %v504, 0.003921569
        %v1017 = vmul.f32 %v505, 0.003921569
        %v1018 = vmul.f32 %v506, 0.003921569
        %v1019 = vmul.f32 %v507, 0.003921569
        %v1020 = vmul.f32 %v508, 0.003921569
        %v1021 = vmul.f32 %v509, 0.003921569
        %v1022 = vmul.f32 %v510, 0.003921569
        %v1023 = vmul.f32 %v511, 0.003921569
        %v1024 = vmul.f32 %v512, 0.003921569
        %v1025 = vmul.f32 %v513, 0.003921569
        %v1026 = vmul.f32 %v514, 0.003921569
        %v1027 = vmul.f32 %v515, 0.003921569
        %v1028 = vmul.f32 %v516, 0.003921569
        %v1029 = vmul.f32 %v517, 0.003921569
        %v1030 = vmul.f32 %v518, 0.003921569
        %v1031 = vmul.f32 %v519, 0.003921569
        %v1032 = vmul.f32 %v520, 0.003921569
        %v1033 = vmul.f32 %v521, 0.003921569
        %v1034 = vmul.f32 %v522, 0.003921569
        %v1035 = vmul.f32 %v523, 0.003921569
        %v1036 = vmul.f32 %v524, 0.003921569
        %v1037 = vmul.f32 %v525, 0.003921569
        %v1038 = vmul.f32 %v526, 0.003921569
        %v1039 = vmul.f32 %v527, 0.003921569
        %v1040 = vmul.f32 %v528, 0.003921569
        %v1041 = vmul.f32 %v529, 0.003921569
        %v1042 = vmul.f32 %v530, 0.003921569
        %v1043 = vmul.f32 %v531, 0.003921569
        %v1044 = vmul.f32 %v532, 0.003921569
        %v1045 = vmul.f32 %v533, 0.003921569
        %v1046 = vmul.f32 %v534, 0.003921569
        %v1047 = vmul.f32 %v535, 0.003921569
        %v1048 = vmul.f32 %v536, 0.003921569
        %v1049 = vmul.f32 %v537, 0.003921569
        %v1050 = vmul.f32 %v538, 0.003921569
        %v1051 = vmul.f32 %v539, 0.003921569
        %v1052 = vmul.f32 %v540, 0.003921569
        %v1053 = vmul.f32 %v541, 0.003921569
        %v1054 = vmul.f32 %v542, 0.003921569
        %v1055 = vmul.f32 %v543, 0.003921569
        %v1056 = vmul.f32 %v544, 0.003921569
        %v1057 = vmul.f32 %v545, 0.003921569
        %v1058 = vmul.f32 %v546, 0.003921569
        %v1059 = vmul.f32 %v547, 0.003921569
        %v1060 = vmul.f32 %v548, 0.003921569
        %v1061 = vmul.f32 %v549, 0.003921569
        %v1062 = vmul.f32 %v550, 0.003921569
        %v1063 = vmul.f32 %v551, 0.003921569
        %v1064 = vmul.f32 %v552, 0.003921569
        %v1065 = vmul.f32 %v553, 0.003921569
        %v1066 = vmul.f32 %v554, 0.003921569
        %v1067 = vmul.f32 %v555, 0.003921569
        %v1068 = vmul.f32 %v556, 0.003921569
        %v1069 = vmul.f32 %v557, 0.003921569
        %v1070 = vmul.f32 %v558, 0.003921569
        %v1071 = vmul.f32 %v559, 0.003921569
        %v1072 = vmul.f32 %v560, 0.003921569
        %v1073 = vmul.f32 %v561, 0.003921569
        %v1074 = vmul.f32 %v562, 0.003921569
        %v1075 = vmul.f32 %v563, 0.003921569
        %v1076 = vmul.f32 %v564, 0.003921569
        %v1077 = vmul.f32 %v565, 0.003921569
        %v1078 = vmul.f32 %v566, 0.003921569
        %v1079 = vmul.f32 %v567, 0.003921569
        %v1080 = vmul.f32 %v568, 0.003921569
        %v1081 = vmul.f32 %v569, 0.003921569
        %v1082 = vmul.f32 %v570, 0.003921569
        %v1083 = vmul.f32 %v571, 0.003921569
        %v1084 = vmul.f32 %v572, 0.003921569
        %v1085 = vmul.f32 %v573, 0.003921569
        %v1086 = vmul.f32 %v574, 0.003921569
        %v1087 = vmul.f32 %v575, 0.003921569
        %v1088 = vmul.f32 %v576, 0.003921569
        %v1089 = vmul.f32 %v577, 0.003921569
        %v1090 = vmul.f32 %v578, 0.003921569
        %v1091 = vmul.f32 %v579, 0.003921569
        %v1092 = vmul.f32 %v580, 0.003921569
        %v1093 = vmul.f32 %v581, 0.003921569
        %v1094 = vmul.f32 %v582, 0.003921569
        %v1095 = vmul.f32 %v583, 0.003921569
        %v1096 = vmul.f32 %v584, 0.003921569
        %v1097 = vmul.f32 %v585, 0.003921569
        %v1098 = vmul.f32 %v586, 0.003921569
        %v1099 = vmul.f32 %v587, 0.003921569
        %v1100 = vmul.f32 %v588, 0.003921569
        %v1101 = vmul.f32 %v589, 0.003921569
        %v1102 = vmul.f32 %v590, 0.003921569
        %v1103 = vmul.f32 %v591, 0.003921569
        %v1104 = vmul.f32 %v592, 0.003921569
        %v1105 = vmul.f32 %v593, 0.003921569
        %v1106 = vmul.f32 %v594, 0.003921569
        %v1107 = vmul.f32 %v595, 0.003921569
        %v1108 = vmul.f32 %v596, 0.003921569
        %v1109 = vmul.f32 %v597, 0.003921569
        %v1110 = vmul.f32 %v598, 0.003921569
        %v1111 = vmul.f32 %v599, 0.003921569
        %v1112 = vmul.f32 %v600, 0.003921569
        %v1113 = vmul.f32 %v601, 0.003921569
        %v1114 = vmul.f32 %v602, 0.003921569
        %v1115 = vmul.f32 %v603, 0.003921569
        %v1116 = vmul.f32 %v604, 0.003921569
        %v1117 = vmul.f32 %v605, 0.003921569
        %v1118 = vmul.f32 %v606, 0.003921569
        %v1119 = vmul.f32 %v607, 0.003921569
        %v1120 = vmul.f32 %v608, 0.003921569
        %v1121 = vmul.f32 %v609, 0.003921569
        %v1122 = vmul.f32 %v610, 0.003921569
        %v1123 = vmul.f32 %v611, 0.003921569
        %v1124 = vmul.f32 %v612, 0.003921569
        %v1125 = vmul.f32 %v613, 0.003921569
        %v1126 = vmul.f32 %v614, 0.003921569
        %v1127 = vmul.f32 %v615, 0.003921569
        %v1128 = vmul.f32 %v616, 0.003921569
        %v1129 = vmul.f32 %v617, 0.003921569
        %v1130 = vmul.f32 %v618, 0.003921569
        %v1131 = vmul.f32 %v619, 0.003921569
        %v1132 = vmul.f32 %v620, 0.003921569
        %v1133 = vmul.f32 %v621, 0.003921569
        %v1134 = vmul.f32 %v622, 0.003921569
        %v1135 = vmul.f32 %v623, 0.003921569
        %v1136 = vmul.f32 %v624, 0.003921569
        %v1137 = vmul.f32 %v625, 0.003921569
        %v1138 = vmul.f32 %v626, 0.003921569
        %v1139 = vmul.f32 %v627, 0.003921569
        %v1140 = vmul.f32 %v628, 0.003921569
        %v1141 = vmul.f32 %v629, 0.003921569
        %v1142 = vmul.f32 %v630, 0.003921569
        %v1143 = vmul.f32 %v631, 0.003921569
        %v1144 = vmul.f32 %v632, 0.003921569
        %v1145 = vmul.f32 %v633, 0.003921569
        %v1146 = vmul.f32 %v634, 0.003921569
        %v1147 = vmul.f32 %v635, 0.003921569
        %v1148 = vmul.f32 %v636, 0.003921569
        %v1149 = vmul.f32 %v637, 0.003921569
        %v1150 = vmul.f32 %v638, 0.003921569
        %v1151 = vmul.f32 %v639, 0.003921569
        %v1152 = vmul.f32 %v640, 0.003921569
        %v1153 = vmul.f32 %v641, 0.003921569
        %v1154 = vmul.f32 %v642, 0.003921569
        %v1155 = vmul.f32 %v643, 0.003921569
        %v1156 = vmul.f32 %v644, 0.003921569
        %v1157 = vmul.f32 %v645, 0.003921569
        %v1158 = vmul.f32 %v646, 0.003921569
        %v1159 = vmul.f32 %v647, 0.003921569
        %v1160 = vmul.f32 %v648, 0.003921569
        %1161 = vst [vmem:[%s134] sm:$0xff] %v649
        %1162 = vst [vmem:[%s134 + $0x8] sm:$0xff] %v650
        %1163 = vst [vmem:[%s134 + $0x10] sm:$0xff] %v651
        %1164 = vst [vmem:[%s134 + $0x18] sm:$0xff] %v652
        %1165 = vst [vmem:[%s134 + $0x20] sm:$0xff] %v653
        %1166 = vst [vmem:[%s134 + $0x28] sm:$0xff] %v654
        %1167 = vst [vmem:[%s134 + $0x30] sm:$0xff] %v655
        %1168 = vst [vmem:[%s134 + $0x38] sm:$0xff] %v656
        %1169 = vst [vmem:[%s134 + $0x40] sm:$0xff] %v657
        %1170 = vst [vmem:[%s134 + $0x48] sm:$0xff] %v658
        %1171 = vst [vmem:[%s134 + $0x50] sm:$0xff] %v659
        %1172 = vst [vmem:[%s134 + $0x58] sm:$0xff] %v660
        %1173 = vst [vmem:[%s134 + $0x60] sm:$0xff] %v661
        %1174 = vst [vmem:[%s134 + $0x68] sm:$0xff] %v662
        %1175 = vst [vmem:[%s134 + $0x70] sm:$0xff] %v663
        %1176 = vst [vmem:[%s134 + $0x78] sm:$0xff] %v664
        %1177 = vst [vmem:[%s134 + $0x80] sm:$0xff] %v665
        %1178 = vst [vmem:[%s134 + $0x88] sm:$0xff] %v666
        %1179 = vst [vmem:[%s134 + $0x90] sm:$0xff] %v667
        %1180 = vst [vmem:[%s134 + $0x98] sm:$0xff] %v668
        %1181 = vst [vmem:[%s134 + $0xa0] sm:$0xff] %v669
        %1182 = vst [vmem:[%s134 + $0xa8] sm:$0xff] %v670
        %1183 = vst [vmem:[%s134 + $0xb0] sm:$0xff] %v671
        %1184 = vst [vmem:[%s134 + $0xb8] sm:$0xff] %v672
        %1185 = vst [vmem:[%s134 + $0xc0] sm:$0xff] %v673
        %1186 = vst [vmem:[%s134 + $0xc8] sm:$0xff] %v674
        %1187 = vst [vmem:[%s134 + $0xd0] sm:$0xff] %v675
        %1188 = vst [vmem:[%s134 + $0xd8] sm:$0xff] %v676
        %1189 = vst [vmem:[%s134 + $0xe0] sm:$0xff] %v677
        %1190 = vst [vmem:[%s134 + $0xe8] sm:$0xff] %v678
        %1191 = vst [vmem:[%s134 + $0xf0] sm:$0xff] %v679
        %1192 = vst [vmem:[%s134 + $0xf8] sm:$0xff] %v680
        %1193 = vst [vmem:[%s134 + $0x100] sm:$0xff] %v681
        %1194 = vst [vmem:[%s134 + $0x108] sm:$0xff] %v682
        %1195 = vst [vmem:[%s134 + $0x110] sm:$0xff] %v683
        %1196 = vst [vmem:[%s134 + $0x118] sm:$0xff] %v684
        %1197 = vst [vmem:[%s134 + $0x120] sm:$0xff] %v685
        %1198 = vst [vmem:[%s134 + $0x128] sm:$0xff] %v686
        %1199 = vst [vmem:[%s134 + $0x130] sm:$0xff] %v687
        %1200 = vst [vmem:[%s134 + $0x138] sm:$0xff] %v688
        %1201 = vst [vmem:[%s134 + $0x140] sm:$0xff] %v689
        %1202 = vst [vmem:[%s134 + $0x148] sm:$0xff] %v690
        %1203 = vst [vmem:[%s134 + $0x150] sm:$0xff] %v691
        %1204 = vst [vmem:[%s134 + $0x158] sm:$0xff] %v692
        %1205 = vst [vmem:[%s134 + $0x160] sm:$0xff] %v693
        %1206 = vst [vmem:[%s134 + $0x168] sm:$0xff] %v694
        %1207 = vst [vmem:[%s134 + $0x170] sm:$0xff] %v695
        %1208 = vst [vmem:[%s134 + $0x178] sm:$0xff] %v696
        %1209 = vst [vmem:[%s134 + $0x180] sm:$0xff] %v697
        %1210 = vst [vmem:[%s134 + $0x188] sm:$0xff] %v698
        %1211 = vst [vmem:[%s134 + $0x190] sm:$0xff] %v699
        %1212 = vst [vmem:[%s134 + $0x198] sm:$0xff] %v700
        %1213 = vst [vmem:[%s134 + $0x1a0] sm:$0xff] %v701
        %1214 = vst [vmem:[%s134 + $0x1a8] sm:$0xff] %v702
        %1215 = vst [vmem:[%s134 + $0x1b0] sm:$0xff] %v703
        %1216 = vst [vmem:[%s134 + $0x1b8] sm:$0xff] %v704
        %1217 = vst [vmem:[%s134 + $0x1c0] sm:$0xff] %v705
        %1218 = vst [vmem:[%s134 + $0x1c8] sm:$0xff] %v706
        %1219 = vst [vmem:[%s134 + $0x1d0] sm:$0xff] %v707
        %1220 = vst [vmem:[%s134 + $0x1d8] sm:$0xff] %v708
        %1221 = vst [vmem:[%s134 + $0x1e0] sm:$0xff] %v709
        %1222 = vst [vmem:[%s134 + $0x1e8] sm:$0xff] %v710
        %1223 = vst [vmem:[%s134 + $0x1f0] sm:$0xff] %v711
        %1224 = vst [vmem:[%s134 + $0x1f8] sm:$0xff] %v712
        %1225 = vst [vmem:[%s134 + $0x200] sm:$0xff] %v713
        %1226 = vst [vmem:[%s134 + $0x208] sm:$0xff] %v714
        %1227 = vst [vmem:[%s134 + $0x210] sm:$0xff] %v715
        %1228 = vst [vmem:[%s134 + $0x218] sm:$0xff] %v716
        %1229 = vst [vmem:[%s134 + $0x220] sm:$0xff] %v717
        %1230 = vst [vmem:[%s134 + $0x228] sm:$0xff] %v718
        %1231 = vst [vmem:[%s134 + $0x230] sm:$0xff] %v719
        %1232 = vst [vmem:[%s134 + $0x238] sm:$0xff] %v720
        %1233 = vst [vmem:[%s134 + $0x240] sm:$0xff] %v721
        %1234 = vst [vmem:[%s134 + $0x248] sm:$0xff] %v722
        %1235 = vst [vmem:[%s134 + $0x250] sm:$0xff] %v723
        %1236 = vst [vmem:[%s134 + $0x258] sm:$0xff] %v724
        %1237 = vst [vmem:[%s134 + $0x260] sm:$0xff] %v725
        %1238 = vst [vmem:[%s134 + $0x268] sm:$0xff] %v726
        %1239 = vst [vmem:[%s134 + $0x270] sm:$0xff] %v727
        %1240 = vst [vmem:[%s134 + $0x278] sm:$0xff] %v728
        %1241 = vst [vmem:[%s134 + $0x280] sm:$0xff] %v729
        %1242 = vst [vmem:[%s134 + $0x288] sm:$0xff] %v730
        %1243 = vst [vmem:[%s134 + $0x290] sm:$0xff] %v731
        %1244 = vst [vmem:[%s134 + $0x298] sm:$0xff] %v732
        %1245 = vst [vmem:[%s134 + $0x2a0] sm:$0xff] %v733
        %1246 = vst [vmem:[%s134 + $0x2a8] sm:$0xff] %v734
        %1247 = vst [vmem:[%s134 + $0x2b0] sm:$0xff] %v735
        %1248 = vst [vmem:[%s134 + $0x2b8] sm:$0xff] %v736
        %1249 = vst [vmem:[%s134 + $0x2c0] sm:$0xff] %v737
        %1250 = vst [vmem:[%s134 + $0x2c8] sm:$0xff] %v738
        %1251 = vst [vmem:[%s134 + $0x2d0] sm:$0xff] %v739
        %1252 = vst [vmem:[%s134 + $0x2d8] sm:$0xff] %v740
        %1253 = vst [vmem:[%s134 + $0x2e0] sm:$0xff] %v741
        %1254 = vst [vmem:[%s134 + $0x2e8] sm:$0xff] %v742
        %1255 = vst [vmem:[%s134 + $0x2f0] sm:$0xff] %v743
        %1256 = vst [vmem:[%s134 + $0x2f8] sm:$0xff] %v744
        %1257 = vst [vmem:[%s134 + $0x300] sm:$0xff] %v745
        %1258 = vst [vmem:[%s134 + $0x308] sm:$0xff] %v746
        %1259 = vst [vmem:[%s134 + $0x310] sm:$0xff] %v747
        %1260 = vst [vmem:[%s134 + $0x318] sm:$0xff] %v748
        %1261 = vst [vmem:[%s134 + $0x320] sm:$0xff] %v749
        %1262 = vst [vmem:[%s134 + $0x328] sm:$0xff] %v750
        %1263 = vst [vmem:[%s134 + $0x330] sm:$0xff] %v751
        %1264 = vst [vmem:[%s134 + $0x338] sm:$0xff] %v752
        %1265 = vst [vmem:[%s134 + $0x340] sm:$0xff] %v753
        %1266 = vst [vmem:[%s134 + $0x348] sm:$0xff] %v754
        %1267 = vst [vmem:[%s134 + $0x350] sm:$0xff] %v755
        %1268 = vst [vmem:[%s134 + $0x358] sm:$0xff] %v756
        %1269 = vst [vmem:[%s134 + $0x360] sm:$0xff] %v757
        %1270 = vst [vmem:[%s134 + $0x368] sm:$0xff] %v758
        %1271 = vst [vmem:[%s134 + $0x370] sm:$0xff] %v759
        %1272 = vst [vmem:[%s134 + $0x378] sm:$0xff] %v760
        %1273 = vst [vmem:[%s134 + $0x380] sm:$0xff] %v761
        %1274 = vst [vmem:[%s134 + $0x388] sm:$0xff] %v762
        %1275 = vst [vmem:[%s134 + $0x390] sm:$0xff] %v763
        %1276 = vst [vmem:[%s134 + $0x398] sm:$0xff] %v764
        %1277 = vst [vmem:[%s134 + $0x3a0] sm:$0xff] %v765
        %1278 = vst [vmem:[%s134 + $0x3a8] sm:$0xff] %v766
        %1279 = vst [vmem:[%s134 + $0x3b0] sm:$0xff] %v767
        %1280 = vst [vmem:[%s134 + $0x3b8] sm:$0xff] %v768
        %1281 = vst [vmem:[%s134 + $0x3c0] sm:$0xff] %v769
        %1282 = vst [vmem:[%s134 + $0x3c8] sm:$0xff] %v770
        %1283 = vst [vmem:[%s134 + $0x3d0] sm:$0xff] %v771
        %1284 = vst [vmem:[%s134 + $0x3d8] sm:$0xff] %v772
        %1285 = vst [vmem:[%s134 + $0x3e0] sm:$0xff] %v773
        %1286 = vst [vmem:[%s134 + $0x3e8] sm:$0xff] %v774
        %1287 = vst [vmem:[%s134 + $0x3f0] sm:$0xff] %v775
        %1288 = vst [vmem:[%s134 + $0x3f8] sm:$0xff] %v776
        %1289 = vst [vmem:[%s134 + $0x400] sm:$0xff] %v777
        %1290 = vst [vmem:[%s134 + $0x408] sm:$0xff] %v778
        %1291 = vst [vmem:[%s134 + $0x410] sm:$0xff] %v779
        %1292 = vst [vmem:[%s134 + $0x418] sm:$0xff] %v780
        %1293 = vst [vmem:[%s134 + $0x420] sm:$0xff] %v781
        %1294 = vst [vmem:[%s134 + $0x428] sm:$0xff] %v782
        %1295 = vst [vmem:[%s134 + $0x430] sm:$0xff] %v783
        %1296 = vst [vmem:[%s134 + $0x438] sm:$0xff] %v784
        %1297 = vst [vmem:[%s134 + $0x440] sm:$0xff] %v785
        %1298 = vst [vmem:[%s134 + $0x448] sm:$0xff] %v786
        %1299 = vst [vmem:[%s134 + $0x450] sm:$0xff] %v787
        %1300 = vst [vmem:[%s134 + $0x458] sm:$0xff] %v788
        %1301 = vst [vmem:[%s134 + $0x460] sm:$0xff] %v789
        %1302 = vst [vmem:[%s134 + $0x468] sm:$0xff] %v790
        %1303 = vst [vmem:[%s134 + $0x470] sm:$0xff] %v791
        %1304 = vst [vmem:[%s134 + $0x478] sm:$0xff] %v792
        %1305 = vst [vmem:[%s134 + $0x480] sm:$0xff] %v793
        %1306 = vst [vmem:[%s134 + $0x488] sm:$0xff] %v794
        %1307 = vst [vmem:[%s134 + $0x490] sm:$0xff] %v795
        %1308 = vst [vmem:[%s134 + $0x498] sm:$0xff] %v796
        %1309 = vst [vmem:[%s134 + $0x4a0] sm:$0xff] %v797
        %1310 = vst [vmem:[%s134 + $0x4a8] sm:$0xff] %v798
        %1311 = vst [vmem:[%s134 + $0x4b0] sm:$0xff] %v799
        %1312 = vst [vmem:[%s134 + $0x4b8] sm:$0xff] %v800
        %1313 = vst [vmem:[%s134 + $0x4c0] sm:$0xff] %v801
        %1314 = vst [vmem:[%s134 + $0x4c8] sm:$0xff] %v802
        %1315 = vst [vmem:[%s134 + $0x4d0] sm:$0xff] %v803
        %1316 = vst [vmem:[%s134 + $0x4d8] sm:$0xff] %v804
        %1317 = vst [vmem:[%s134 + $0x4e0] sm:$0xff] %v805
        %1318 = vst [vmem:[%s134 + $0x4e8] sm:$0xff] %v806
        %1319 = vst [vmem:[%s134 + $0x4f0] sm:$0xff] %v807
        %1320 = vst [vmem:[%s134 + $0x4f8] sm:$0xff] %v808
        %1321 = vst [vmem:[%s134 + $0x500] sm:$0xff] %v809
        %1322 = vst [vmem:[%s134 + $0x508] sm:$0xff] %v810
        %1323 = vst [vmem:[%s134 + $0x510] sm:$0xff] %v811
        %1324 = vst [vmem:[%s134 + $0x518] sm:$0xff] %v812
        %1325 = vst [vmem:[%s134 + $0x520] sm:$0xff] %v813
        %1326 = vst [vmem:[%s134 + $0x528] sm:$0xff] %v814
        %1327 = vst [vmem:[%s134 + $0x530] sm:$0xff] %v815
        %1328 = vst [vmem:[%s134 + $0x538] sm:$0xff] %v816
        %1329 = vst [vmem:[%s134 + $0x540] sm:$0xff] %v817
        %1330 = vst [vmem:[%s134 + $0x548] sm:$0xff] %v818
        %1331 = vst [vmem:[%s134 + $0x550] sm:$0xff] %v819
        %1332 = vst [vmem:[%s134 + $0x558] sm:$0xff] %v820
        %1333 = vst [vmem:[%s134 + $0x560] sm:$0xff] %v821
        %1334 = vst [vmem:[%s134 + $0x568] sm:$0xff] %v822
        %1335 = vst [vmem:[%s134 + $0x570] sm:$0xff] %v823
        %1336 = vst [vmem:[%s134 + $0x578] sm:$0xff] %v824
        %1337 = vst [vmem:[%s134 + $0x580] sm:$0xff] %v825
        %1338 = vst [vmem:[%s134 + $0x588] sm:$0xff] %v826
        %1339 = vst [vmem:[%s134 + $0x590] sm:$0xff] %v827
        %1340 = vst [vmem:[%s134 + $0x598] sm:$0xff] %v828
        %1341 = vst [vmem:[%s134 + $0x5a0] sm:$0xff] %v829
        %1342 = vst [vmem:[%s134 + $0x5a8] sm:$0xff] %v830
        %1343 = vst [vmem:[%s134 + $0x5b0] sm:$0xff] %v831
        %1344 = vst [vmem:[%s134 + $0x5b8] sm:$0xff] %v832
        %1345 = vst [vmem:[%s134 + $0x5c0] sm:$0xff] %v833
        %1346 = vst [vmem:[%s134 + $0x5c8] sm:$0xff] %v834
        %1347 = vst [vmem:[%s134 + $0x5d0] sm:$0xff] %v835
        %1348 = vst [vmem:[%s134 + $0x5d8] sm:$0xff] %v836
        %1349 = vst [vmem:[%s134 + $0x5e0] sm:$0xff] %v837
        %1350 = vst [vmem:[%s134 + $0x5e8] sm:$0xff] %v838
        %1351 = vst [vmem:[%s134 + $0x5f0] sm:$0xff] %v839
        %1352 = vst [vmem:[%s134 + $0x5f8] sm:$0xff] %v840
        %1353 = vst [vmem:[%s134 + $0x600] sm:$0xff] %v841
        %1354 = vst [vmem:[%s134 + $0x608] sm:$0xff] %v842
        %1355 = vst [vmem:[%s134 + $0x610] sm:$0xff] %v843
        %1356 = vst [vmem:[%s134 + $0x618] sm:$0xff] %v844
        %1357 = vst [vmem:[%s134 + $0x620] sm:$0xff] %v845
        %1358 = vst [vmem:[%s134 + $0x628] sm:$0xff] %v846
        %1359 = vst [vmem:[%s134 + $0x630] sm:$0xff] %v847
        %1360 = vst [vmem:[%s134 + $0x638] sm:$0xff] %v848
        %1361 = vst [vmem:[%s134 + $0x640] sm:$0xff] %v849
        %1362 = vst [vmem:[%s134 + $0x648] sm:$0xff] %v850
        %1363 = vst [vmem:[%s134 + $0x650] sm:$0xff] %v851
        %1364 = vst [vmem:[%s134 + $0x658] sm:$0xff] %v852
        %1365 = vst [vmem:[%s134 + $0x660] sm:$0xff] %v853
        %1366 = vst [vmem:[%s134 + $0x668] sm:$0xff] %v854
        %1367 = vst [vmem:[%s134 + $0x670] sm:$0xff] %v855
        %1368 = vst [vmem:[%s134 + $0x678] sm:$0xff] %v856
        %1369 = vst [vmem:[%s134 + $0x680] sm:$0xff] %v857
        %1370 = vst [vmem:[%s134 + $0x688] sm:$0xff] %v858
        %1371 = vst [vmem:[%s134 + $0x690] sm:$0xff] %v859
        %1372 = vst [vmem:[%s134 + $0x698] sm:$0xff] %v860
        %1373 = vst [vmem:[%s134 + $0x6a0] sm:$0xff] %v861
        %1374 = vst [vmem:[%s134 + $0x6a8] sm:$0xff] %v862
        %1375 = vst [vmem:[%s134 + $0x6b0] sm:$0xff] %v863
        %1376 = vst [vmem:[%s134 + $0x6b8] sm:$0xff] %v864
        %1377 = vst [vmem:[%s134 + $0x6c0] sm:$0xff] %v865
        %1378 = vst [vmem:[%s134 + $0x6c8] sm:$0xff] %v866
        %1379 = vst [vmem:[%s134 + $0x6d0] sm:$0xff] %v867
        %1380 = vst [vmem:[%s134 + $0x6d8] sm:$0xff] %v868
        %1381 = vst [vmem:[%s134 + $0x6e0] sm:$0xff] %v869
        %1382 = vst [vmem:[%s134 + $0x6e8] sm:$0xff] %v870
        %1383 = vst [vmem:[%s134 + $0x6f0] sm:$0xff] %v871
        %1384 = vst [vmem:[%s134 + $0x6f8] sm:$0xff] %v872
        %1385 = vst [vmem:[%s134 + $0x700] sm:$0xff] %v873
        %1386 = vst [vmem:[%s134 + $0x708] sm:$0xff] %v874
        %1387 = vst [vmem:[%s134 + $0x710] sm:$0xff] %v875
        %1388 = vst [vmem:[%s134 + $0x718] sm:$0xff] %v876
        %1389 = vst [vmem:[%s134 + $0x720] sm:$0xff] %v877
        %1390 = vst [vmem:[%s134 + $0x728] sm:$0xff] %v878
        %1391 = vst [vmem:[%s134 + $0x730] sm:$0xff] %v879
        %1392 = vst [vmem:[%s134 + $0x738] sm:$0xff] %v880
        %1393 = vst [vmem:[%s134 + $0x740] sm:$0xff] %v881
        %1394 = vst [vmem:[%s134 + $0x748] sm:$0xff] %v882
        %1395 = vst [vmem:[%s134 + $0x750] sm:$0xff] %v883
        %1396 = vst [vmem:[%s134 + $0x758] sm:$0xff] %v884
        %1397 = vst [vmem:[%s134 + $0x760] sm:$0xff] %v885
        %1398 = vst [vmem:[%s134 + $0x768] sm:$0xff] %v886
        %1399 = vst [vmem:[%s134 + $0x770] sm:$0xff] %v887
        %1400 = vst [vmem:[%s134 + $0x778] sm:$0xff] %v888
        %1401 = vst [vmem:[%s134 + $0x780] sm:$0xff] %v889
        %1402 = vst [vmem:[%s134 + $0x788] sm:$0xff] %v890
        %1403 = vst [vmem:[%s134 + $0x790] sm:$0xff] %v891
        %1404 = vst [vmem:[%s134 + $0x798] sm:$0xff] %v892
        %1405 = vst [vmem:[%s134 + $0x7a0] sm:$0xff] %v893
        %1406 = vst [vmem:[%s134 + $0x7a8] sm:$0xff] %v894
        %1407 = vst [vmem:[%s134 + $0x7b0] sm:$0xff] %v895
        %1408 = vst [vmem:[%s134 + $0x7b8] sm:$0xff] %v896
        %1409 = vst [vmem:[%s134 + $0x7c0] sm:$0xff] %v897
        %1410 = vst [vmem:[%s134 + $0x7c8] sm:$0xff] %v898
        %1411 = vst [vmem:[%s134 + $0x7d0] sm:$0xff] %v899
        %1412 = vst [vmem:[%s134 + $0x7d8] sm:$0xff] %v900
        %1413 = vst [vmem:[%s134 + $0x7e0] sm:$0xff] %v901
        %1414 = vst [vmem:[%s134 + $0x7e8] sm:$0xff] %v902
        %1415 = vst [vmem:[%s134 + $0x7f0] sm:$0xff] %v903
        %1416 = vst [vmem:[%s134 + $0x7f8] sm:$0xff] %v904
        %1417 = vst [vmem:[%s134 + $0x800] sm:$0xff] %v905
        %1418 = vst [vmem:[%s134 + $0x808] sm:$0xff] %v906
        %1419 = vst [vmem:[%s134 + $0x810] sm:$0xff] %v907
        %1420 = vst [vmem:[%s134 + $0x818] sm:$0xff] %v908
        %1421 = vst [vmem:[%s134 + $0x820] sm:$0xff] %v909
        %1422 = vst [vmem:[%s134 + $0x828] sm:$0xff] %v910
        %1423 = vst [vmem:[%s134 + $0x830] sm:$0xff] %v911
        %1424 = vst [vmem:[%s134 + $0x838] sm:$0xff] %v912
        %1425 = vst [vmem:[%s134 + $0x840] sm:$0xff] %v913
        %1426 = vst [vmem:[%s134 + $0x848] sm:$0xff] %v914
        %1427 = vst [vmem:[%s134 + $0x850] sm:$0xff] %v915
        %1428 = vst [vmem:[%s134 + $0x858] sm:$0xff] %v916
        %1429 = vst [vmem:[%s134 + $0x860] sm:$0xff] %v917
        %1430 = vst [vmem:[%s134 + $0x868] sm:$0xff] %v918
        %1431 = vst [vmem:[%s134 + $0x870] sm:$0xff] %v919
        %1432 = vst [vmem:[%s134 + $0x878] sm:$0xff] %v920
        %1433 = vst [vmem:[%s134 + $0x880] sm:$0xff] %v921
        %1434 = vst [vmem:[%s134 + $0x888] sm:$0xff] %v922
        %1435 = vst [vmem:[%s134 + $0x890] sm:$0xff] %v923
        %1436 = vst [vmem:[%s134 + $0x898] sm:$0xff] %v924
        %1437 = vst [vmem:[%s134 + $0x8a0] sm:$0xff] %v925
        %1438 = vst [vmem:[%s134 + $0x8a8] sm:$0xff] %v926
        %1439 = vst [vmem:[%s134 + $0x8b0] sm:$0xff] %v927
        %1440 = vst [vmem:[%s134 + $0x8b8] sm:$0xff] %v928
        %1441 = vst [vmem:[%s134 + $0x8c0] sm:$0xff] %v929
        %1442 = vst [vmem:[%s134 + $0x8c8] sm:$0xff] %v930
        %1443 = vst [vmem:[%s134 + $0x8d0] sm:$0xff] %v931
        %1444 = vst [vmem:[%s134 + $0x8d8] sm:$0xff] %v932
        %1445 = vst [vmem:[%s134 + $0x8e0] sm:$0xff] %v933
        %1446 = vst [vmem:[%s134 + $0x8e8] sm:$0xff] %v934
        %1447 = vst [vmem:[%s134 + $0x8f0] sm:$0xff] %v935
        %1448 = vst [vmem:[%s134 + $0x8f8] sm:$0xff] %v936
        %1449 = vst [vmem:[%s134 + $0x900] sm:$0xff] %v937
        %1450 = vst [vmem:[%s134 + $0x908] sm:$0xff] %v938
        %1451 = vst [vmem:[%s134 + $0x910] sm:$0xff] %v939
        %1452 = vst [vmem:[%s134 + $0x918] sm:$0xff] %v940
        %1453 = vst [vmem:[%s134 + $0x920] sm:$0xff] %v941
        %1454 = vst [vmem:[%s134 + $0x928] sm:$0xff] %v942
        %1455 = vst [vmem:[%s134 + $0x930] sm:$0xff] %v943
        %1456 = vst [vmem:[%s134 + $0x938] sm:$0xff] %v944
        %1457 = vst [vmem:[%s134 + $0x940] sm:$0xff] %v945
        %1458 = vst [vmem:[%s134 + $0x948] sm:$0xff] %v946
        %1459 = vst [vmem:[%s134 + $0x950] sm:$0xff] %v947
        %1460 = vst [vmem:[%s134 + $0x958] sm:$0xff] %v948
        %1461 = vst [vmem:[%s134 + $0x960] sm:$0xff] %v949
        %1462 = vst [vmem:[%s134 + $0x968] sm:$0xff] %v950
        %1463 = vst [vmem:[%s134 + $0x970] sm:$0xff] %v951
        %1464 = vst [vmem:[%s134 + $0x978] sm:$0xff] %v952
        %1465 = vst [vmem:[%s134 + $0x980] sm:$0xff] %v953
        %1466 = vst [vmem:[%s134 + $0x988] sm:$0xff] %v954
        %1467 = vst [vmem:[%s134 + $0x990] sm:$0xff] %v955
        %1468 = vst [vmem:[%s134 + $0x998] sm:$0xff] %v956
        %1469 = vst [vmem:[%s134 + $0x9a0] sm:$0xff] %v957
        %1470 = vst [vmem:[%s134 + $0x9a8] sm:$0xff] %v958
        %1471 = vst [vmem:[%s134 + $0x9b0] sm:$0xff] %v959
        %1472 = vst [vmem:[%s134 + $0x9b8] sm:$0xff] %v960
        %1473 = vst [vmem:[%s134 + $0x9c0] sm:$0xff] %v961
        %1474 = vst [vmem:[%s134 + $0x9c8] sm:$0xff] %v962
        %1475 = vst [vmem:[%s134 + $0x9d0] sm:$0xff] %v963
        %1476 = vst [vmem:[%s134 + $0x9d8] sm:$0xff] %v964
        %1477 = vst [vmem:[%s134 + $0x9e0] sm:$0xff] %v965
        %1478 = vst [vmem:[%s134 + $0x9e8] sm:$0xff] %v966
        %1479 = vst [vmem:[%s134 + $0x9f0] sm:$0xff] %v967
        %1480 = vst [vmem:[%s134 + $0x9f8] sm:$0xff] %v968
        %1481 = vst [vmem:[%s134 + $0xa00] sm:$0xff] %v969
        %1482 = vst [vmem:[%s134 + $0xa08] sm:$0xff] %v970
        %1483 = vst [vmem:[%s134 + $0xa10] sm:$0xff] %v971
        %1484 = vst [vmem:[%s134 + $0xa18] sm:$0xff] %v972
        %1485 = vst [vmem:[%s134 + $0xa20] sm:$0xff] %v973
        %1486 = vst [vmem:[%s134 + $0xa28] sm:$0xff] %v974
        %1487 = vst [vmem:[%s134 + $0xa30] sm:$0xff] %v975
        %1488 = vst [vmem:[%s134 + $0xa38] sm:$0xff] %v976
        %1489 = vst [vmem:[%s134 + $0xa40] sm:$0xff] %v977
        %1490 = vst [vmem:[%s134 + $0xa48] sm:$0xff] %v978
        %1491 = vst [vmem:[%s134 + $0xa50] sm:$0xff] %v979
        %1492 = vst [vmem:[%s134 + $0xa58] sm:$0xff] %v980
        %1493 = vst [vmem:[%s134 + $0xa60] sm:$0xff] %v981
        %1494 = vst [vmem:[%s134 + $0xa68] sm:$0xff] %v982
        %1495 = vst [vmem:[%s134 + $0xa70] sm:$0xff] %v983
        %1496 = vst [vmem:[%s134 + $0xa78] sm:$0xff] %v984
        %1497 = vst [vmem:[%s134 + $0xa80] sm:$0xff] %v985
        %1498 = vst [vmem:[%s134 + $0xa88] sm:$0xff] %v986
        %1499 = vst [vmem:[%s134 + $0xa90] sm:$0xff] %v987
        %1500 = vst [vmem:[%s134 + $0xa98] sm:$0xff] %v988
        %1501 = vst [vmem:[%s134 + $0xaa0] sm:$0xff] %v989
        %1502 = vst [vmem:[%s134 + $0xaa8] sm:$0xff] %v990
        %1503 = vst [vmem:[%s134 + $0xab0] sm:$0xff] %v991
        %1504 = vst [vmem:[%s134 + $0xab8] sm:$0xff] %v992
        %1505 = vst [vmem:[%s134 + $0xac0] sm:$0xff] %v993
        %1506 = vst [vmem:[%s134 + $0xac8] sm:$0xff] %v994
        %1507 = vst [vmem:[%s134 + $0xad0] sm:$0xff] %v995
        %1508 = vst [vmem:[%s134 + $0xad8] sm:$0xff] %v996
        %1509 = vst [vmem:[%s134 + $0xae0] sm:$0xff] %v997
        %1510 = vst [vmem:[%s134 + $0xae8] sm:$0xff] %v998
        %1511 = vst [vmem:[%s134 + $0xaf0] sm:$0xff] %v999
        %1512 = vst [vmem:[%s134 + $0xaf8] sm:$0xff] %v1000
        %1513 = vst [vmem:[%s134 + $0xb00] sm:$0xff] %v1001
        %1514 = vst [vmem:[%s134 + $0xb08] sm:$0xff] %v1002
        %1515 = vst [vmem:[%s134 + $0xb10] sm:$0xff] %v1003
        %1516 = vst [vmem:[%s134 + $0xb18] sm:$0xff] %v1004
        %1517 = vst [vmem:[%s134 + $0xb20] sm:$0xff] %v1005
        %1518 = vst [vmem:[%s134 + $0xb28] sm:$0xff] %v1006
        %1519 = vst [vmem:[%s134 + $0xb30] sm:$0xff] %v1007
        %1520 = vst [vmem:[%s134 + $0xb38] sm:$0xff] %v1008
        %1521 = vst [vmem:[%s134 + $0xb40] sm:$0xff] %v1009
        %1522 = vst [vmem:[%s134 + $0xb48] sm:$0xff] %v1010
        %1523 = vst [vmem:[%s134 + $0xb50] sm:$0xff] %v1011
        %1524 = vst [vmem:[%s134 + $0xb58] sm:$0xff] %v1012
        %1525 = vst [vmem:[%s134 + $0xb60] sm:$0xff] %v1013
        %1526 = vst [vmem:[%s134 + $0xb68] sm:$0xff] %v1014
        %1527 = vst [vmem:[%s134 + $0xb70] sm:$0xff] %v1015
        %1528 = vst [vmem:[%s134 + $0xb78] sm:$0xff] %v1016
        %1529 = vst [vmem:[%s134 + $0xb80] sm:$0xff] %v1017
        %1530 = vst [vmem:[%s134 + $0xb88] sm:$0xff] %v1018
        %1531 = vst [vmem:[%s134 + $0xb90] sm:$0xff] %v1019
        %1532 = vst [vmem:[%s134 + $0xb98] sm:$0xff] %v1020
        %1533 = vst [vmem:[%s134 + $0xba0] sm:$0xff] %v1021
        %1534 = vst [vmem:[%s134 + $0xba8] sm:$0xff] %v1022
        %1535 = vst [vmem:[%s134 + $0xbb0] sm:$0xff] %v1023
        %1536 = vst [vmem:[%s134 + $0xbb8] sm:$0xff] %v1024
        %1537 = vst [vmem:[%s134 + $0xbc0] sm:$0xff] %v1025
        %1538 = vst [vmem:[%s134 + $0xbc8] sm:$0xff] %v1026
        %1539 = vst [vmem:[%s134 + $0xbd0] sm:$0xff] %v1027
        %1540 = vst [vmem:[%s134 + $0xbd8] sm:$0xff] %v1028
        %1541 = vst [vmem:[%s134 + $0xbe0] sm:$0xff] %v1029
        %1542 = vst [vmem:[%s134 + $0xbe8] sm:$0xff] %v1030
        %1543 = vst [vmem:[%s134 + $0xbf0] sm:$0xff] %v1031
        %1544 = vst [vmem:[%s134 + $0xbf8] sm:$0xff] %v1032
        %1545 = vst [vmem:[%s134 + $0xc00] sm:$0xff] %v1033
        %1546 = vst [vmem:[%s134 + $0xc08] sm:$0xff] %v1034
        %1547 = vst [vmem:[%s134 + $0xc10] sm:$0xff] %v1035
        %1548 = vst [vmem:[%s134 + $0xc18] sm:$0xff] %v1036
        %1549 = vst [vmem:[%s134 + $0xc20] sm:$0xff] %v1037
        %1550 = vst [vmem:[%s134 + $0xc28] sm:$0xff] %v1038
        %1551 = vst [vmem:[%s134 + $0xc30] sm:$0xff] %v1039
        %1552 = vst [vmem:[%s134 + $0xc38] sm:$0xff] %v1040
        %1553 = vst [vmem:[%s134 + $0xc40] sm:$0xff] %v1041
        %1554 = vst [vmem:[%s134 + $0xc48] sm:$0xff] %v1042
        %1555 = vst [vmem:[%s134 + $0xc50] sm:$0xff] %v1043
        %1556 = vst [vmem:[%s134 + $0xc58] sm:$0xff] %v1044
        %1557 = vst [vmem:[%s134 + $0xc60] sm:$0xff] %v1045
        %1558 = vst [vmem:[%s134 + $0xc68] sm:$0xff] %v1046
        %1559 = vst [vmem:[%s134 + $0xc70] sm:$0xff] %v1047
        %1560 = vst [vmem:[%s134 + $0xc78] sm:$0xff] %v1048
        %1561 = vst [vmem:[%s134 + $0xc80] sm:$0xff] %v1049
        %1562 = vst [vmem:[%s134 + $0xc88] sm:$0xff] %v1050
        %1563 = vst [vmem:[%s134 + $0xc90] sm:$0xff] %v1051
        %1564 = vst [vmem:[%s134 + $0xc98] sm:$0xff] %v1052
        %1565 = vst [vmem:[%s134 + $0xca0] sm:$0xff] %v1053
        %1566 = vst [vmem:[%s134 + $0xca8] sm:$0xff] %v1054
        %1567 = vst [vmem:[%s134 + $0xcb0] sm:$0xff] %v1055
        %1568 = vst [vmem:[%s134 + $0xcb8] sm:$0xff] %v1056
        %1569 = vst [vmem:[%s134 + $0xcc0] sm:$0xff] %v1057
        %1570 = vst [vmem:[%s134 + $0xcc8] sm:$0xff] %v1058
        %1571 = vst [vmem:[%s134 + $0xcd0] sm:$0xff] %v1059
        %1572 = vst [vmem:[%s134 + $0xcd8] sm:$0xff] %v1060
        %1573 = vst [vmem:[%s134 + $0xce0] sm:$0xff] %v1061
        %1574 = vst [vmem:[%s134 + $0xce8] sm:$0xff] %v1062
        %1575 = vst [vmem:[%s134 + $0xcf0] sm:$0xff] %v1063
        %1576 = vst [vmem:[%s134 + $0xcf8] sm:$0xff] %v1064
        %1577 = vst [vmem:[%s134 + $0xd00] sm:$0xff] %v1065
        %1578 = vst [vmem:[%s134 + $0xd08] sm:$0xff] %v1066
        %1579 = vst [vmem:[%s134 + $0xd10] sm:$0xff] %v1067
        %1580 = vst [vmem:[%s134 + $0xd18] sm:$0xff] %v1068
        %1581 = vst [vmem:[%s134 + $0xd20] sm:$0xff] %v1069
        %1582 = vst [vmem:[%s134 + $0xd28] sm:$0xff] %v1070
        %1583 = vst [vmem:[%s134 + $0xd30] sm:$0xff] %v1071
        %1584 = vst [vmem:[%s134 + $0xd38] sm:$0xff] %v1072
        %1585 = vst [vmem:[%s134 + $0xd40] sm:$0xff] %v1073
        %1586 = vst [vmem:[%s134 + $0xd48] sm:$0xff] %v1074
        %1587 = vst [vmem:[%s134 + $0xd50] sm:$0xff] %v1075
        %1588 = vst [vmem:[%s134 + $0xd58] sm:$0xff] %v1076
        %1589 = vst [vmem:[%s134 + $0xd60] sm:$0xff] %v1077
        %1590 = vst [vmem:[%s134 + $0xd68] sm:$0xff] %v1078
        %1591 = vst [vmem:[%s134 + $0xd70] sm:$0xff] %v1079
        %1592 = vst [vmem:[%s134 + $0xd78] sm:$0xff] %v1080
        %1593 = vst [vmem:[%s134 + $0xd80] sm:$0xff] %v1081
        %1594 = vst [vmem:[%s134 + $0xd88] sm:$0xff] %v1082
        %1595 = vst [vmem:[%s134 + $0xd90] sm:$0xff] %v1083
        %1596 = vst [vmem:[%s134 + $0xd98] sm:$0xff] %v1084
        %1597 = vst [vmem:[%s134 + $0xda0] sm:$0xff] %v1085
        %1598 = vst [vmem:[%s134 + $0xda8] sm:$0xff] %v1086
        %1599 = vst [vmem:[%s134 + $0xdb0] sm:$0xff] %v1087
        %1600 = vst [vmem:[%s134 + $0xdb8] sm:$0xff] %v1088
        %1601 = vst [vmem:[%s134 + $0xdc0] sm:$0xff] %v1089
        %1602 = vst [vmem:[%s134 + $0xdc8] sm:$0xff] %v1090
        %1603 = vst [vmem:[%s134 + $0xdd0] sm:$0xff] %v1091
        %1604 = vst [vmem:[%s134 + $0xdd8] sm:$0xff] %v1092
        %1605 = vst [vmem:[%s134 + $0xde0] sm:$0xff] %v1093
        %1606 = vst [vmem:[%s134 + $0xde8] sm:$0xff] %v1094
        %1607 = vst [vmem:[%s134 + $0xdf0] sm:$0xff] %v1095
        %1608 = vst [vmem:[%s134 + $0xdf8] sm:$0xff] %v1096
        %1609 = vst [vmem:[%s134 + $0xe00] sm:$0xff] %v1097
        %1610 = vst [vmem:[%s134 + $0xe08] sm:$0xff] %v1098
        %1611 = vst [vmem:[%s134 + $0xe10] sm:$0xff] %v1099
        %1612 = vst [vmem:[%s134 + $0xe18] sm:$0xff] %v1100
        %1613 = vst [vmem:[%s134 + $0xe20] sm:$0xff] %v1101
        %1614 = vst [vmem:[%s134 + $0xe28] sm:$0xff] %v1102
        %1615 = vst [vmem:[%s134 + $0xe30] sm:$0xff] %v1103
        %1616 = vst [vmem:[%s134 + $0xe38] sm:$0xff] %v1104
        %1617 = vst [vmem:[%s134 + $0xe40] sm:$0xff] %v1105
        %1618 = vst [vmem:[%s134 + $0xe48] sm:$0xff] %v1106
        %1619 = vst [vmem:[%s134 + $0xe50] sm:$0xff] %v1107
        %1620 = vst [vmem:[%s134 + $0xe58] sm:$0xff] %v1108
        %1621 = vst [vmem:[%s134 + $0xe60] sm:$0xff] %v1109
        %1622 = vst [vmem:[%s134 + $0xe68] sm:$0xff] %v1110
        %1623 = vst [vmem:[%s134 + $0xe70] sm:$0xff] %v1111
        %1624 = vst [vmem:[%s134 + $0xe78] sm:$0xff] %v1112
        %1625 = vst [vmem:[%s134 + $0xe80] sm:$0xff] %v1113
        %1626 = vst [vmem:[%s134 + $0xe88] sm:$0xff] %v1114
        %1627 = vst [vmem:[%s134 + $0xe90] sm:$0xff] %v1115
        %1628 = vst [vmem:[%s134 + $0xe98] sm:$0xff] %v1116
        %1629 = vst [vmem:[%s134 + $0xea0] sm:$0xff] %v1117
        %1630 = vst [vmem:[%s134 + $0xea8] sm:$0xff] %v1118
        %1631 = vst [vmem:[%s134 + $0xeb0] sm:$0xff] %v1119
        %1632 = vst [vmem:[%s134 + $0xeb8] sm:$0xff] %v1120
        %1633 = vst [vmem:[%s134 + $0xec0] sm:$0xff] %v1121
        %1634 = vst [vmem:[%s134 + $0xec8] sm:$0xff] %v1122
        %1635 = vst [vmem:[%s134 + $0xed0] sm:$0xff] %v1123
        %1636 = vst [vmem:[%s134 + $0xed8] sm:$0xff] %v1124
        %1637 = vst [vmem:[%s134 + $0xee0] sm:$0xff] %v1125
        %1638 = vst [vmem:[%s134 + $0xee8] sm:$0xff] %v1126
        %1639 = vst [vmem:[%s134 + $0xef0] sm:$0xff] %v1127
        %1640 = vst [vmem:[%s134 + $0xef8] sm:$0xff] %v1128
        %1641 = vst [vmem:[%s134 + $0xf00] sm:$0xff] %v1129
        %1642 = vst [vmem:[%s134 + $0xf08] sm:$0xff] %v1130
        %1643 = vst [vmem:[%s134 + $0xf10] sm:$0xff] %v1131
        %1644 = vst [vmem:[%s134 + $0xf18] sm:$0xff] %v1132
        %1645 = vst [vmem:[%s134 + $0xf20] sm:$0xff] %v1133
        %1646 = vst [vmem:[%s134 + $0xf28] sm:$0xff] %v1134
        %1647 = vst [vmem:[%s134 + $0xf30] sm:$0xff] %v1135
        %1648 = vst [vmem:[%s134 + $0xf38] sm:$0xff] %v1136
        %1649 = vst [vmem:[%s134 + $0xf40] sm:$0xff] %v1137
        %1650 = vst [vmem:[%s134 + $0xf48] sm:$0xff] %v1138
        %1651 = vst [vmem:[%s134 + $0xf50] sm:$0xff] %v1139
        %1652 = vst [vmem:[%s134 + $0xf58] sm:$0xff] %v1140
        %1653 = vst [vmem:[%s134 + $0xf60] sm:$0xff] %v1141
        %1654 = vst [vmem:[%s134 + $0xf68] sm:$0xff] %v1142
        %1655 = vst [vmem:[%s134 + $0xf70] sm:$0xff] %v1143
        %1656 = vst [vmem:[%s134 + $0xf78] sm:$0xff] %v1144
        %1657 = vst [vmem:[%s134 + $0xf80] sm:$0xff] %v1145
        %1658 = vst [vmem:[%s134 + $0xf88] sm:$0xff] %v1146
        %1659 = vst [vmem:[%s134 + $0xf90] sm:$0xff] %v1147
        %1660 = vst [vmem:[%s134 + $0xf98] sm:$0xff] %v1148
        %1661 = vst [vmem:[%s134 + $0xfa0] sm:$0xff] %v1149
        %1662 = vst [vmem:[%s134 + $0xfa8] sm:$0xff] %v1150
        %1663 = vst [vmem:[%s134 + $0xfb0] sm:$0xff] %v1151
        %1664 = vst [vmem:[%s134 + $0xfb8] sm:$0xff] %v1152
        %1665 = vst [vmem:[%s134 + $0xfc0] sm:$0xff] %v1153
        %1666 = vst [vmem:[%s134 + $0xfc8] sm:$0xff] %v1154
        %1667 = vst [vmem:[%s134 + $0xfd0] sm:$0xff] %v1155
        %1668 = vst [vmem:[%s134 + $0xfd8] sm:$0xff] %v1156
        %1669 = vst [vmem:[%s134 + $0xfe0] sm:$0xff] %v1157
        %1670 = vst [vmem:[%s134 + $0xfe8] sm:$0xff] %v1158
        %1671 = vst [vmem:[%s134 + $0xff0] sm:$0xff] %v1159
        %1672 = vst [vmem:[%s134 + $0xff8] sm:$0xff] %v1160
        %s1673 = sand.u32 %s52, 1
        %s1674 = scalar_lea.sflag [#allocation4], %s1673
        %s1675 = sand.u32 %s52, 1
        %s1676 = smul.addr %s1675, 4096
        %s1677 = scalar_lea.vmem [#allocation5], %s1676
        // Predicated region
        $region29: #{tpu_custom_call.1} parent=23 // pred_check
          %p1678 = pneg %p62
        $region30: #{tpu_custom_call.1} parent=23 // pred_check_branch
          %1680 = sbr.rel (%p1678) target = $region32
        $region31: #{tpu_custom_call.1} parent=23 // pred_region
          %s1681 = smul.u32 512, %s18
          %s1683 = ssub.s32 65536, 65536
          %1684 = vsyncadd %s1674, %s1683
          %s1685 = smul.addr %s1681, 128
          %s1686 = scalar_lea.hbm %s1, %s1685
          %s1687 = sshll.u32 %s1677, 4
          %s1688 = int_to_ptr.vmem [resolvable:$true] %s1687
          %1693 = dma.vmem_to_hbm [thread:$0]  %s1688, 65536, %s1686, %s1674, 128, 128, 8
        $region32: #{tpu_custom_call.1} parent=23 // pred_fallthru
          _
      $region24: #{tpu_custom_call.1} parent=5 // pred_fallthru
        _
      %p1694 = scmp.le.s32.totalorder 2, %s13
      // Predicated region
      $region33: #{tpu_custom_call.1} parent=5 // pred_check
        %p1695 = pneg %p1694
      $region34: #{tpu_custom_call.1} parent=5 // pred_check_branch
        %1697 = sbr.rel (%p1695) target = $region36
      $region35: #{tpu_custom_call.1} parent=5 // pred_region
        %s1698 = ssub.s32 %s13, 2
        // Predicated region
        $region37: #{tpu_custom_call.1} parent=35 // pred_check
          %p1699 = pneg %p68
        $region38: #{tpu_custom_call.1} parent=35 // pred_check_branch
          %1701 = sbr.rel (%p1699) target = $region40
        $region39: #{tpu_custom_call.1} parent=35 // pred_region
          %s1702 = sand.u32 %s53, 1
          %s1703 = scalar_lea.sflag [#allocation4], %s1702
          %s1704 = sand.u32 %s53, 1
          %s1705 = smul.addr %s1704, 4096
          %s1706 = scalar_lea.vmem [#allocation5], %s1705
          %1707 = dma.done %s1703, 65536
        $region40: #{tpu_custom_call.1} parent=35 // pred_fallthru
          _
      $region36: #{tpu_custom_call.1} parent=5 // pred_fallthru
        _
    $region6: #{tpu_custom_call.1} parent=1 // loop_footer
      %s17 = sadd.s32 1, %s13
    $region7: #{tpu_custom_call.1} parent=1 // loop_footer_branch
      %12 = sbr.rel target = $region3
    $region8: #{tpu_custom_call.1} parent=1 // loop_exit
      _
    %1708 = vsyncpa [#allocation3], 1
    %s1709 = scalar_lea.sflag [#allocation3], 1
    %1710 = vsyncpa %s1709, 1
    %1711 = vsyncpa [#allocation4], 1
    %s1712 = scalar_lea.sflag [#allocation4], 1
    %1713 = vsyncpa %s1712, 1

</llo_original>
